<compile_context>
chip_gen: v6e
topology: v6e:2x2x1
jax: 0.10.0
libtpu: 0.0.40
codegen_flags: <defaults>
</compile_context>

<pallas_src>
import jax
import jax.numpy as jnp
from jax import lax
from jax.experimental import pallas as pl
from jax.experimental.pallas import tpu as pltpu


# ----------------------------- Pallas kernel --------------------------------


def _lstm_encoder_kernel(x_ref, wih_ref, whh_ref, b_ref, len_ref,
                         out_ref, xproj_ref):
    TB, _ = x_ref.shape            # (T*Bp, E), bf16
    Hp = whh_ref.shape[0]          # padded hidden dim (multiple of 128)
    Bp = len_ref.shape[0]          # padded batch (multiple of 8)
    T = TB // Bp

    # Hoisted input projection: one big bf16 MXU matmul (f32 accumulate) done
    # once, off the serial recurrence critical path.  No in-kernel reshapes.
    xproj_ref[...] = (
        jnp.dot(x_ref[...], wih_ref[...], preferred_element_type=jnp.float32)
        + b_ref[...]
    )

    whh = whh_ref[...]             # (Hp, 4Hp) bf16, resident across the loop
    lens = len_ref[...]            # (Bp, 1) int32

    def body(t, carry):
        h, c = carry
        # Sublane-aligned dynamic row-window into the 2-D xproj scratch.
        off = pl.multiple_of(t * Bp, Bp)
        x_t = xproj_ref[pl.ds(off, Bp), :]                      # (Bp, 4Hp) f32
        # Only the recurrent matmul remains inside the serial loop.
        gates = x_t + jnp.dot(h.astype(whh.dtype), whh,
                              preferred_element_type=jnp.float32)
        # Lane-tile-aligned per-gate activations (sigmoid for i/f/o, tanh for g).
        i_g = jax.nn.sigmoid(gates[:, 0 * Hp:1 * Hp])
        f_g = jax.nn.sigmoid(gates[:, 1 * Hp:2 * Hp])
        g_g = jnp.tanh(gates[:, 2 * Hp:3 * Hp])
        o_g = jax.nn.sigmoid(gates[:, 3 * Hp:4 * Hp])
        c_new = f_g * c + i_g * g_g
        h_new = o_g * jnp.tanh(c_new)
        # pack_padded_sequence semantics: freeze h once t >= len[b].  c needs
        # no freeze: lengths are monotone and only h is returned.
        valid = t < lens                                        # (Bp, 1) bool
        h = jnp.where(valid, h_new, h)
        return (h, c_new)

    h0 = jnp.zeros((Bp, Hp), jnp.float32)
    c0 = jnp.zeros((Bp, Hp), jnp.float32)
    # Fully unrolled short fixed-trip-count loop (T = 8).
    h_final, _ = lax.fori_loop(0, T, body, (h0, c0), unroll=True)

    out_ref[...] = h_final         # single full-lane store of h_n


# ------------------------------ host wrapper ---------------------------------


def lstm_encoder_pallas(sent, sent_len, wih, whh, b):
    """sent: (T, B, E) time-major f32; sent_len: (B,) int; wih (E,4H),
    whh (H,4H), b = b_ih + b_hh as (1,4H).  Returns h_n (B, H) f32."""
    T, B, E = sent.shape
    H = whh.shape[0]

    SUB, LANE = 8, 128
    Bp = max(SUB, ((B + SUB - 1) // SUB) * SUB)        # sublane-dense batch
    Hp = max(LANE, ((H + LANE - 1) // LANE) * LANE)    # lane-dense hidden

    # Per-gate zero padding of the (·, 4H) weight columns to the lane tile
    # (gate order i,f,g,o preserved).  Zero padding is exact: padded gates get
    # bias 0 -> g=0, c_pad stays 0, h_pad stays 0 and never feeds real columns.
    # In a real model these would be padded once at weight-load time.
    def pad_gates(w, rows_to):
        r, four_h = w.shape
        h = four_h // 4
        w4 = w.reshape(r, 4, h)
        w4 = jnp.pad(w4, ((0, rows_to - r), (0, 0), (0, Hp - h)))
        return w4.reshape(rows_to, 4 * Hp)

    wih_p = pad_gates(wih, E).astype(jnp.bfloat16)
    whh_p = pad_gates(whh, Hp).astype(jnp.bfloat16)
    b_p = pad_gates(b, 1).astype(jnp.float32)

    # Pad batch, flatten time*batch in the wrapper (no in-kernel relayouts),
    # cast activations to bf16 for the MXU.
    sent_p = jnp.pad(sent, ((0, 0), (0, Bp - B), (0, 0)))
    x2d = sent_p.reshape(T * Bp, E).astype(jnp.bfloat16)
    lens = jnp.pad(sent_len.astype(jnp.int32), (0, Bp - B)).reshape(Bp, 1)

    full = lambda shape: pl.BlockSpec(shape, lambda i: (0,) * len(shape))
    cost = pl.CostEstimate(
        flops=2 * T * Bp * E * 4 * Hp + 2 * T * Bp * Hp * 4 * Hp,
        transcendentals=T * Bp * 5 * Hp,
        bytes_accessed=(x2d.size * 2 + wih_p.size * 2 + whh_p.size * 2
                        + b_p.size * 4 + lens.size * 4 + Bp * Hp * 4),
    )

    out = pl.pallas_call(
        _lstm_encoder_kernel,
        grid=(1,),
        in_specs=[full((T * Bp, E)),
                  full((E, 4 * Hp)),
                  full((Hp, 4 * Hp)),
                  full((1, 4 * Hp)),
                  full((Bp, 1))],
        out_specs=full((Bp, Hp)),
        out_shape=jax.ShapeDtypeStruct((Bp, Hp), jnp.float32),
        scratch_shapes=[pltpu.VMEM((T * Bp, 4 * Hp), jnp.float32)],
        compiler_params=pltpu.CompilerParams(
            dimension_semantics=("arbitrary",)),
        cost_estimate=cost,
    )(x2d, wih_p, whh_p, b_p, lens)

    return out[:B, :H]


# ------------------------------ JAX reference --------------------------------


def reference_forward(sent, sent_len, wih, whh, b):
    T, B, E = sent.shape
    H = whh.shape[0]
    lens = sent_len.astype(jnp.int32)

    def step(carry, inp):
        h, c = carry
        x_t, t = inp
        gates = x_t @ wih + h @ whh + b
        i_g = jax.nn.sigmoid(gates[:, :H])
        f_g = jax.nn.sigmoid(gates[:, H:2 * H])
        g_g = jnp.tanh(gates[:, 2 * H:3 * H])
        o_g = jax.nn.sigmoid(gates[:, 3 * H:])
        c_new = f_g * c + i_g * g_g
        h_new = o_g * jnp.tanh(c_new)
        valid = (t < lens)[:, None]
        h = jnp.where(valid, h_new, h)
        c = jnp.where(valid, c_new, c)
        return (h, c), None

    init = (jnp.zeros((B, H), jnp.float32), jnp.zeros((B, H), jnp.float32))
    (h_final, _), _ = lax.scan(step, init, (sent, jnp.arange(T)))
    return h_final


# ---------------------------------- main -------------------------------------


if __name__ == "__main__":
    T, B, E, H = 8, 2, 16, 32          # seq, batch, word_emb_dim, enc_lstm_dim

    key = jax.random.PRNGKey(0)
    ks = jax.random.split(key, 6)
    scale = 0.1
    wih = scale * jax.random.normal(ks[0], (E, 4 * H), jnp.float32)
    whh = scale * jax.random.normal(ks[1], (H, 4 * H), jnp.float32)
    b = scale * jax.random.normal(ks[2], (1, 4 * H), jnp.float32)

    sent = jax.random.normal(ks[3], (T, B, E), jnp.float32)
    # Ragged lengths to exercise the pack_padded_sequence semantics.
    sent_len = jnp.array([T, 5], jnp.int32)

    emb = lstm_encoder_pallas(sent, sent_len, wih, whh, b)
    emb = jax.block_until_ready(emb)

    ref = jax.block_until_ready(reference_forward(sent, sent_len, wih, whh, b))
    assert emb.shape == (B, H), emb.shape
    # bf16 weights/activations on the MXU (f32 accumulate) -> ~1e-3 level diffs.
    assert jnp.allclose(emb, ref, rtol=2e-2, atol=2e-2), \
        float(jnp.max(jnp.abs(emb - ref)))

    print("KERNEL_OK")
</pallas_src>

<mosaic_0001>
module attributes {stable_mosaic.version = 11 : i64} {
  func.func @_lstm_encoder_kernel(%arg0: i32, %arg1: memref<64x16xbf16, #tpu.memory_space<vmem>>, %arg2: memref<16x512xbf16, #tpu.memory_space<vmem>>, %arg3: memref<128x512xbf16, #tpu.memory_space<vmem>>, %arg4: memref<1x512xf32, #tpu.memory_space<vmem>>, %arg5: memref<8x1xi32, #tpu.memory_space<vmem>>, %arg6: memref<8x128xf32, #tpu.memory_space<vmem>>, %arg7: memref<64x512xf32, #tpu.memory_space<vmem>>) attributes {dimension_semantics = [#tpu.dimension_semantics<arbitrary>], iteration_bounds = array<i64: 1>, scalar_prefetch = 0 : i64, scratch_operands = 1 : i64, tpu.core_type = #tpu.core_type<tc>, window_params = [{pipeline_mode = #tpu.pipeline_mode<synchronous>, transform_indices = @transform_0, window_bounds = array<i64: 64, 16>}, {pipeline_mode = #tpu.pipeline_mode<synchronous>, transform_indices = @transform_1, window_bounds = array<i64: 16, 512>}, {pipeline_mode = #tpu.pipeline_mode<synchronous>, transform_indices = @transform_2, window_bounds = array<i64: 128, 512>}, {pipeline_mode = #tpu.pipeline_mode<synchronous>, transform_indices = @transform_3, window_bounds = array<i64: 1, 512>}, {pipeline_mode = #tpu.pipeline_mode<synchronous>, transform_indices = @transform_4, window_bounds = array<i64: 8, 1>}, {pipeline_mode = #tpu.pipeline_mode<synchronous>, transform_indices = @transform_5, window_bounds = array<i64: 8, 128>}]} {
    %c0 = arith.constant 0 : index
    %c0_0 = arith.constant 0 : index
    %0 = vector.load %arg1[%c0, %c0_0] : memref<64x16xbf16, #tpu.memory_space<vmem>>, vector<64x16xbf16>
    %c0_1 = arith.constant 0 : index
    %c0_2 = arith.constant 0 : index
    %1 = vector.load %arg2[%c0_1, %c0_2] : memref<16x512xbf16, #tpu.memory_space<vmem>>, vector<16x512xbf16>
    %cst = arith.constant dense<0.000000e+00> : vector<64x512xf32>
    %2 = tpu.matmul %0, %1, %cst {dimension_numbers = #tpu.dot_dimension_numbers<[1], [0], [0], [1], [0, 0, 1, 1], [], []>} : vector<64x16xbf16>, vector<16x512xbf16>, vector<64x512xf32> -> vector<64x512xf32>
    %c0_3 = arith.constant 0 : index
    %c0_4 = arith.constant 0 : index
    %3 = vector.load %arg4[%c0_3, %c0_4] : memref<1x512xf32, #tpu.memory_space<vmem>>, vector<1x512xf32>
    %4 = vector.broadcast %3 : vector<1x512xf32> to vector<64x512xf32>
    %5 = arith.addf %2, %4 : vector<64x512xf32>
    %c0_5 = arith.constant 0 : index
    %c0_6 = arith.constant 0 : index
    %6 = vector.load %arg7[%c0_5, %c0_6] : memref<64x512xf32, #tpu.memory_space<vmem>>, vector<64x512xf32>
    tpu.vector_store %arg7[%c0_5, %c0_6], %5 {strides = array<i32>} : memref<64x512xf32, #tpu.memory_space<vmem>>, vector<64x512xf32>,
    %c0_7 = arith.constant 0 : index
    %c0_8 = arith.constant 0 : index
    %7 = vector.load %arg3[%c0_7, %c0_8] : memref<128x512xbf16, #tpu.memory_space<vmem>>, vector<128x512xbf16>
    %c0_9 = arith.constant 0 : index
    %c0_10 = arith.constant 0 : index
    %8 = vector.load %arg5[%c0_9, %c0_10] : memref<8x1xi32, #tpu.memory_space<vmem>>, vector<8x1xi32>
    %cst_11 = arith.constant 0.000000e+00 : f32
    %9 = vector.broadcast %cst_11 : f32 to vector<8x128xf32>
    %cst_12 = arith.constant 0.000000e+00 : f32
    %10 = vector.broadcast %cst_12 : f32 to vector<8x128xf32>
    %c0_i32 = arith.constant 0 : i32
    %c8_i32 = arith.constant 8 : i32
    %11 = arith.muli %c0_i32, %c8_i32 : i32
    %12 = tpu.assume_multiple %11, 8 : i32
    %13 = arith.index_cast %12 : i32 to index
    %c0_13 = arith.constant 0 : index
    %14 = vector.load %arg7[%13, %c0_13] : memref<64x512xf32, #tpu.memory_space<vmem>>, vector<8x512xf32>
    %15 = arith.truncf %9 : vector<8x128xf32> to vector<8x128xbf16>
    %cst_14 = arith.constant dense<0.000000e+00> : vector<8x512xf32>
    %16 = tpu.matmul %15, %7, %cst_14 {dimension_numbers = #tpu.dot_dimension_numbers<[1], [0], [0], [1], [0, 0, 1, 1], [], []>} : vector<8x128xbf16>, vector<128x512xbf16>, vector<8x512xf32> -> vector<8x512xf32>
    %17 = arith.addf %14, %16 : vector<8x512xf32>
    %18 = vector.extract_strided_slice %17 {offsets = [0, 0], sizes = [8, 128], strides = [1, 1]} : vector<8x512xf32> to vector<8x128xf32>
    %19 = arith.negf %18 : vector<8x128xf32>
    %20 = math.exp %19 : vector<8x128xf32>
    %cst_15 = arith.constant 1.000000e+00 : f32
    %21 = vector.broadcast %cst_15 : f32 to vector<8x128xf32>
    %22 = arith.addf %21, %20 : vector<8x128xf32>
    %23 = arith.divf %21, %22 : vector<8x128xf32>
    %24 = vector.extract_strided_slice %17 {offsets = [0, 128], sizes = [8, 128], strides = [1, 1]} : vector<8x512xf32> to vector<8x128xf32>
    %25 = arith.negf %24 : vector<8x128xf32>
    %26 = math.exp %25 : vector<8x128xf32>
    %cst_16 = arith.constant 1.000000e+00 : f32
    %27 = vector.broadcast %cst_16 : f32 to vector<8x128xf32>
    %28 = arith.addf %27, %26 : vector<8x128xf32>
    %29 = arith.divf %27, %28 : vector<8x128xf32>
    %30 = vector.extract_strided_slice %17 {offsets = [0, 256], sizes = [8, 128], strides = [1, 1]} : vector<8x512xf32> to vector<8x128xf32>
    %31 = math.tanh %30 : vector<8x128xf32>
    %32 = vector.extract_strided_slice %17 {offsets = [0, 384], sizes = [8, 128], strides = [1, 1]} : vector<8x512xf32> to vector<8x128xf32>
    %33 = arith.negf %32 : vector<8x128xf32>
    %34 = math.exp %33 : vector<8x128xf32>
    %cst_17 = arith.constant 1.000000e+00 : f32
    %35 = vector.broadcast %cst_17 : f32 to vector<8x128xf32>
    %36 = arith.addf %35, %34 : vector<8x128xf32>
    %37 = arith.divf %35, %36 : vector<8x128xf32>
    %38 = arith.mulf %29, %10 : vector<8x128xf32>
    %39 = arith.mulf %23, %31 : vector<8x128xf32>
    %40 = arith.addf %38, %39 : vector<8x128xf32>
    %41 = math.tanh %40 : vector<8x128xf32>
    %42 = arith.mulf %37, %41 : vector<8x128xf32>
    %43 = vector.broadcast %c0_i32 : i32 to vector<8x1xi32>
    %44 = arith.cmpi slt, %43, %8 : vector<8x1xi32>
    %45 = vector.shape_cast %44 : vector<8x1xi1> to vector<8x1xi1>
    %46 = vector.broadcast %45 : vector<8x1xi1> to vector<8x128xi1>
    %47 = arith.select %46, %42, %9 : vector<8x128xi1>, vector<8x128xf32>
    %c1_i32 = arith.constant 1 : i32
    %c8_i32_18 = arith.constant 8 : i32
    %48 = arith.muli %c1_i32, %c8_i32_18 : i32
    %49 = tpu.assume_multiple %48, 8 : i32
    %50 = arith.index_cast %49 : i32 to index
    %c0_19 = arith.constant 0 : index
    %51 = vector.load %arg7[%50, %c0_19] : memref<64x512xf32, #tpu.memory_space<vmem>>, vector<8x512xf32>
    %52 = arith.truncf %47 : vector<8x128xf32> to vector<8x128xbf16>
    %cst_20 = arith.constant dense<0.000000e+00> : vector<8x512xf32>
    %53 = tpu.matmul %52, %7, %cst_20 {dimension_numbers = #tpu.dot_dimension_numbers<[1], [0], [0], [1], [0, 0, 1, 1], [], []>} : vector<8x128xbf16>, vector<128x512xbf16>, vector<8x512xf32> -> vector<8x512xf32>
    %54 = arith.addf %51, %53 : vector<8x512xf32>
    %55 = vector.extract_strided_slice %54 {offsets = [0, 0], sizes = [8, 128], strides = [1, 1]} : vector<8x512xf32> to vector<8x128xf32>
    %56 = arith.negf %55 : vector<8x128xf32>
    %57 = math.exp %56 : vector<8x128xf32>
    %cst_21 = arith.constant 1.000000e+00 : f32
    %58 = vector.broadcast %cst_21 : f32 to vector<8x128xf32>
    %59 = arith.addf %58, %57 : vector<8x128xf32>
    %60 = arith.divf %58, %59 : vector<8x128xf32>
    %61 = vector.extract_strided_slice %54 {offsets = [0, 128], sizes = [8, 128], strides = [1, 1]} : vector<8x512xf32> to vector<8x128xf32>
    %62 = arith.negf %61 : vector<8x128xf32>
    %63 = math.exp %62 : vector<8x128xf32>
    %cst_22 = arith.constant 1.000000e+00 : f32
    %64 = vector.broadcast %cst_22 : f32 to vector<8x128xf32>
    %65 = arith.addf %64, %63 : vector<8x128xf32>
    %66 = arith.divf %64, %65 : vector<8x128xf32>
    %67 = vector.extract_strided_slice %54 {offsets = [0, 256], sizes = [8, 128], strides = [1, 1]} : vector<8x512xf32> to vector<8x128xf32>
    %68 = math.tanh %67 : vector<8x128xf32>
    %69 = vector.extract_strided_slice %54 {offsets = [0, 384], sizes = [8, 128], strides = [1, 1]} : vector<8x512xf32> to vector<8x128xf32>
    %70 = arith.negf %69 : vector<8x128xf32>
    %71 = math.exp %70 : vector<8x128xf32>
    %cst_23 = arith.constant 1.000000e+00 : f32
    %72 = vector.broadcast %cst_23 : f32 to vector<8x128xf32>
    %73 = arith.addf %72, %71 : vector<8x128xf32>
    %74 = arith.divf %72, %73 : vector<8x128xf32>
    %75 = arith.mulf %66, %40 : vector<8x128xf32>
    %76 = arith.mulf %60, %68 : vector<8x128xf32>
    %77 = arith.addf %75, %76 : vector<8x128xf32>
    %78 = math.tanh %77 : vector<8x128xf32>
    %79 = arith.mulf %74, %78 : vector<8x128xf32>
    %80 = vector.broadcast %c1_i32 : i32 to vector<8x1xi32>
    %81 = arith.cmpi slt, %80, %8 : vector<8x1xi32>
    %82 = vector.shape_cast %81 : vector<8x1xi1> to vector<8x1xi1>
    %83 = vector.broadcast %82 : vector<8x1xi1> to vector<8x128xi1>
    %84 = arith.select %83, %79, %47 : vector<8x128xi1>, vector<8x128xf32>
    %c2_i32 = arith.constant 2 : i32
    %c8_i32_24 = arith.constant 8 : i32
    %85 = arith.muli %c2_i32, %c8_i32_24 : i32
    %86 = tpu.assume_multiple %85, 8 : i32
    %87 = arith.index_cast %86 : i32 to index
    %c0_25 = arith.constant 0 : index
    %88 = vector.load %arg7[%87, %c0_25] : memref<64x512xf32, #tpu.memory_space<vmem>>, vector<8x512xf32>
    %89 = arith.truncf %84 : vector<8x128xf32> to vector<8x128xbf16>
    %cst_26 = arith.constant dense<0.000000e+00> : vector<8x512xf32>
    %90 = tpu.matmul %89, %7, %cst_26 {dimension_numbers = #tpu.dot_dimension_numbers<[1], [0], [0], [1], [0, 0, 1, 1], [], []>} : vector<8x128xbf16>, vector<128x512xbf16>, vector<8x512xf32> -> vector<8x512xf32>
    %91 = arith.addf %88, %90 : vector<8x512xf32>
    %92 = vector.extract_strided_slice %91 {offsets = [0, 0], sizes = [8, 128], strides = [1, 1]} : vector<8x512xf32> to vector<8x128xf32>
    %93 = arith.negf %92 : vector<8x128xf32>
    %94 = math.exp %93 : vector<8x128xf32>
    %cst_27 = arith.constant 1.000000e+00 : f32
    %95 = vector.broadcast %cst_27 : f32 to vector<8x128xf32>
    %96 = arith.addf %95, %94 : vector<8x128xf32>
    %97 = arith.divf %95, %96 : vector<8x128xf32>
    %98 = vector.extract_strided_slice %91 {offsets = [0, 128], sizes = [8, 128], strides = [1, 1]} : vector<8x512xf32> to vector<8x128xf32>
    %99 = arith.negf %98 : vector<8x128xf32>
    %100 = math.exp %99 : vector<8x128xf32>
    %cst_28 = arith.constant 1.000000e+00 : f32
    %101 = vector.broadcast %cst_28 : f32 to vector<8x128xf32>
    %102 = arith.addf %101, %100 : vector<8x128xf32>
    %103 = arith.divf %101, %102 : vector<8x128xf32>
    %104 = vector.extract_strided_slice %91 {offsets = [0, 256], sizes = [8, 128], strides = [1, 1]} : vector<8x512xf32> to vector<8x128xf32>
    %105 = math.tanh %104 : vector<8x128xf32>
    %106 = vector.extract_strided_slice %91 {offsets = [0, 384], sizes = [8, 128], strides = [1, 1]} : vector<8x512xf32> to vector<8x128xf32>
    %107 = arith.negf %106 : vector<8x128xf32>
    %108 = math.exp %107 : vector<8x128xf32>
    %cst_29 = arith.constant 1.000000e+00 : f32
    %109 = vector.broadcast %cst_29 : f32 to vector<8x128xf32>
    %110 = arith.addf %109, %108 : vector<8x128xf32>
    %111 = arith.divf %109, %110 : vector<8x128xf32>
    %112 = arith.mulf %103, %77 : vector<8x128xf32>
    %113 = arith.mulf %97, %105 : vector<8x128xf32>
    %114 = arith.addf %112, %113 : vector<8x128xf32>
    %115 = math.tanh %114 : vector<8x128xf32>
    %116 = arith.mulf %111, %115 : vector<8x128xf32>
    %117 = vector.broadcast %c2_i32 : i32 to vector<8x1xi32>
    %118 = arith.cmpi slt, %117, %8 : vector<8x1xi32>
    %119 = vector.shape_cast %118 : vector<8x1xi1> to vector<8x1xi1>
    %120 = vector.broadcast %119 : vector<8x1xi1> to vector<8x128xi1>
    %121 = arith.select %120, %116, %84 : vector<8x128xi1>, vector<8x128xf32>
    %c3_i32 = arith.constant 3 : i32
    %c8_i32_30 = arith.constant 8 : i32
    %122 = arith.muli %c3_i32, %c8_i32_30 : i32
    %123 = tpu.assume_multiple %122, 8 : i32
    %124 = arith.index_cast %123 : i32 to index
    %c0_31 = arith.constant 0 : index
    %125 = vector.load %arg7[%124, %c0_31] : memref<64x512xf32, #tpu.memory_space<vmem>>, vector<8x512xf32>
    %126 = arith.truncf %121 : vector<8x128xf32> to vector<8x128xbf16>
    %cst_32 = arith.constant dense<0.000000e+00> : vector<8x512xf32>
    %127 = tpu.matmul %126, %7, %cst_32 {dimension_numbers = #tpu.dot_dimension_numbers<[1], [0], [0], [1], [0, 0, 1, 1], [], []>} : vector<8x128xbf16>, vector<128x512xbf16>, vector<8x512xf32> -> vector<8x512xf32>
    %128 = arith.addf %125, %127 : vector<8x512xf32>
    %129 = vector.extract_strided_slice %128 {offsets = [0, 0], sizes = [8, 128], strides = [1, 1]} : vector<8x512xf32> to vector<8x128xf32>
    %130 = arith.negf %129 : vector<8x128xf32>
    %131 = math.exp %130 : vector<8x128xf32>
    %cst_33 = arith.constant 1.000000e+00 : f32
    %132 = vector.broadcast %cst_33 : f32 to vector<8x128xf32>
    %133 = arith.addf %132, %131 : vector<8x128xf32>
    %134 = arith.divf %132, %133 : vector<8x128xf32>
    %135 = vector.extract_strided_slice %128 {offsets = [0, 128], sizes = [8, 128], strides = [1, 1]} : vector<8x512xf32> to vector<8x128xf32>
    %136 = arith.negf %135 : vector<8x128xf32>
    %137 = math.exp %136 : vector<8x128xf32>
    %cst_34 = arith.constant 1.000000e+00 : f32
    %138 = vector.broadcast %cst_34 : f32 to vector<8x128xf32>
    %139 = arith.addf %138, %137 : vector<8x128xf32>
    %140 = arith.divf %138, %139 : vector<8x128xf32>
    %141 = vector.extract_strided_slice %128 {offsets = [0, 256], sizes = [8, 128], strides = [1, 1]} : vector<8x512xf32> to vector<8x128xf32>
    %142 = math.tanh %141 : vector<8x128xf32>
    %143 = vector.extract_strided_slice %128 {offsets = [0, 384], sizes = [8, 128], strides = [1, 1]} : vector<8x512xf32> to vector<8x128xf32>
    %144 = arith.negf %143 : vector<8x128xf32>
    %145 = math.exp %144 : vector<8x128xf32>
    %cst_35 = arith.constant 1.000000e+00 : f32
    %146 = vector.broadcast %cst_35 : f32 to vector<8x128xf32>
    %147 = arith.addf %146, %145 : vector<8x128xf32>
    %148 = arith.divf %146, %147 : vector<8x128xf32>
    %149 = arith.mulf %140, %114 : vector<8x128xf32>
    %150 = arith.mulf %134, %142 : vector<8x128xf32>
    %151 = arith.addf %149, %150 : vector<8x128xf32>
    %152 = math.tanh %151 : vector<8x128xf32>
    %153 = arith.mulf %148, %152 : vector<8x128xf32>
    %154 = vector.broadcast %c3_i32 : i32 to vector<8x1xi32>
    %155 = arith.cmpi slt, %154, %8 : vector<8x1xi32>
    %156 = vector.shape_cast %155 : vector<8x1xi1> to vector<8x1xi1>
    %157 = vector.broadcast %156 : vector<8x1xi1> to vector<8x128xi1>
    %158 = arith.select %157, %153, %121 : vector<8x128xi1>, vector<8x128xf32>
    %c4_i32 = arith.constant 4 : i32
    %c8_i32_36 = arith.constant 8 : i32
    %159 = arith.muli %c4_i32, %c8_i32_36 : i32
    %160 = tpu.assume_multiple %159, 8 : i32
    %161 = arith.index_cast %160 : i32 to index
    %c0_37 = arith.constant 0 : index
    %162 = vector.load %arg7[%161, %c0_37] : memref<64x512xf32, #tpu.memory_space<vmem>>, vector<8x512xf32>
    %163 = arith.truncf %158 : vector<8x128xf32> to vector<8x128xbf16>
    %cst_38 = arith.constant dense<0.000000e+00> : vector<8x512xf32>
    %164 = tpu.matmul %163, %7, %cst_38 {dimension_numbers = #tpu.dot_dimension_numbers<[1], [0], [0], [1], [0, 0, 1, 1], [], []>} : vector<8x128xbf16>, vector<128x512xbf16>, vector<8x512xf32> -> vector<8x512xf32>
    %165 = arith.addf %162, %164 : vector<8x512xf32>
    %166 = vector.extract_strided_slice %165 {offsets = [0, 0], sizes = [8, 128], strides = [1, 1]} : vector<8x512xf32> to vector<8x128xf32>
    %167 = arith.negf %166 : vector<8x128xf32>
    %168 = math.exp %167 : vector<8x128xf32>
    %cst_39 = arith.constant 1.000000e+00 : f32
    %169 = vector.broadcast %cst_39 : f32 to vector<8x128xf32>
    %170 = arith.addf %169, %168 : vector<8x128xf32>
    %171 = arith.divf %169, %170 : vector<8x128xf32>
    %172 = vector.extract_strided_slice %165 {offsets = [0, 128], sizes = [8, 128], strides = [1, 1]} : vector<8x512xf32> to vector<8x128xf32>
    %173 = arith.negf %172 : vector<8x128xf32>
    %174 = math.exp %173 : vector<8x128xf32>
    %cst_40 = arith.constant 1.000000e+00 : f32
    %175 = vector.broadcast %cst_40 : f32 to vector<8x128xf32>
    %176 = arith.addf %175, %174 : vector<8x128xf32>
    %177 = arith.divf %175, %176 : vector<8x128xf32>
    %178 = vector.extract_strided_slice %165 {offsets = [0, 256], sizes = [8, 128], strides = [1, 1]} : vector<8x512xf32> to vector<8x128xf32>
    %179 = math.tanh %178 : vector<8x128xf32>
    %180 = vector.extract_strided_slice %165 {offsets = [0, 384], sizes = [8, 128], strides = [1, 1]} : vector<8x512xf32> to vector<8x128xf32>
    %181 = arith.negf %180 : vector<8x128xf32>
    %182 = math.exp %181 : vector<8x128xf32>
    %cst_41 = arith.constant 1.000000e+00 : f32
    %183 = vector.broadcast %cst_41 : f32 to vector<8x128xf32>
    %184 = arith.addf %183, %182 : vector<8x128xf32>
    %185 = arith.divf %183, %184 : vector<8x128xf32>
    %186 = arith.mulf %177, %151 : vector<8x128xf32>
    %187 = arith.mulf %171, %179 : vector<8x128xf32>
    %188 = arith.addf %186, %187 : vector<8x128xf32>
    %189 = math.tanh %188 : vector<8x128xf32>
    %190 = arith.mulf %185, %189 : vector<8x128xf32>
    %191 = vector.broadcast %c4_i32 : i32 to vector<8x1xi32>
    %192 = arith.cmpi slt, %191, %8 : vector<8x1xi32>
    %193 = vector.shape_cast %192 : vector<8x1xi1> to vector<8x1xi1>
    %194 = vector.broadcast %193 : vector<8x1xi1> to vector<8x128xi1>
    %195 = arith.select %194, %190, %158 : vector<8x128xi1>, vector<8x128xf32>
    %c5_i32 = arith.constant 5 : i32
    %c8_i32_42 = arith.constant 8 : i32
    %196 = arith.muli %c5_i32, %c8_i32_42 : i32
    %197 = tpu.assume_multiple %196, 8 : i32
    %198 = arith.index_cast %197 : i32 to index
    %c0_43 = arith.constant 0 : index
    %199 = vector.load %arg7[%198, %c0_43] : memref<64x512xf32, #tpu.memory_space<vmem>>, vector<8x512xf32>
    %200 = arith.truncf %195 : vector<8x128xf32> to vector<8x128xbf16>
    %cst_44 = arith.constant dense<0.000000e+00> : vector<8x512xf32>
    %201 = tpu.matmul %200, %7, %cst_44 {dimension_numbers = #tpu.dot_dimension_numbers<[1], [0], [0], [1], [0, 0, 1, 1], [], []>} : vector<8x128xbf16>, vector<128x512xbf16>, vector<8x512xf32> -> vector<8x512xf32>
    %202 = arith.addf %199, %201 : vector<8x512xf32>
    %203 = vector.extract_strided_slice %202 {offsets = [0, 0], sizes = [8, 128], strides = [1, 1]} : vector<8x512xf32> to vector<8x128xf32>
    %204 = arith.negf %203 : vector<8x128xf32>
    %205 = math.exp %204 : vector<8x128xf32>
    %cst_45 = arith.constant 1.000000e+00 : f32
    %206 = vector.broadcast %cst_45 : f32 to vector<8x128xf32>
    %207 = arith.addf %206, %205 : vector<8x128xf32>
    %208 = arith.divf %206, %207 : vector<8x128xf32>
    %209 = vector.extract_strided_slice %202 {offsets = [0, 128], sizes = [8, 128], strides = [1, 1]} : vector<8x512xf32> to vector<8x128xf32>
    %210 = arith.negf %209 : vector<8x128xf32>
    %211 = math.exp %210 : vector<8x128xf32>
    %cst_46 = arith.constant 1.000000e+00 : f32
    %212 = vector.broadcast %cst_46 : f32 to vector<8x128xf32>
    %213 = arith.addf %212, %211 : vector<8x128xf32>
    %214 = arith.divf %212, %213 : vector<8x128xf32>
    %215 = vector.extract_strided_slice %202 {offsets = [0, 256], sizes = [8, 128], strides = [1, 1]} : vector<8x512xf32> to vector<8x128xf32>
    %216 = math.tanh %215 : vector<8x128xf32>
    %217 = vector.extract_strided_slice %202 {offsets = [0, 384], sizes = [8, 128], strides = [1, 1]} : vector<8x512xf32> to vector<8x128xf32>
    %218 = arith.negf %217 : vector<8x128xf32>
    %219 = math.exp %218 : vector<8x128xf32>
    %cst_47 = arith.constant 1.000000e+00 : f32
    %220 = vector.broadcast %cst_47 : f32 to vector<8x128xf32>
    %221 = arith.addf %220, %219 : vector<8x128xf32>
    %222 = arith.divf %220, %221 : vector<8x128xf32>
    %223 = arith.mulf %214, %188 : vector<8x128xf32>
    %224 = arith.mulf %208, %216 : vector<8x128xf32>
    %225 = arith.addf %223, %224 : vector<8x128xf32>
    %226 = math.tanh %225 : vector<8x128xf32>
    %227 = arith.mulf %222, %226 : vector<8x128xf32>
    %228 = vector.broadcast %c5_i32 : i32 to vector<8x1xi32>
    %229 = arith.cmpi slt, %228, %8 : vector<8x1xi32>
    %230 = vector.shape_cast %229 : vector<8x1xi1> to vector<8x1xi1>
    %231 = vector.broadcast %230 : vector<8x1xi1> to vector<8x128xi1>
    %232 = arith.select %231, %227, %195 : vector<8x128xi1>, vector<8x128xf32>
    %c6_i32 = arith.constant 6 : i32
    %c8_i32_48 = arith.constant 8 : i32
    %233 = arith.muli %c6_i32, %c8_i32_48 : i32
    %234 = tpu.assume_multiple %233, 8 : i32
    %235 = arith.index_cast %234 : i32 to index
    %c0_49 = arith.constant 0 : index
    %236 = vector.load %arg7[%235, %c0_49] : memref<64x512xf32, #tpu.memory_space<vmem>>, vector<8x512xf32>
    %237 = arith.truncf %232 : vector<8x128xf32> to vector<8x128xbf16>
    %cst_50 = arith.constant dense<0.000000e+00> : vector<8x512xf32>
    %238 = tpu.matmul %237, %7, %cst_50 {dimension_numbers = #tpu.dot_dimension_numbers<[1], [0], [0], [1], [0, 0, 1, 1], [], []>} : vector<8x128xbf16>, vector<128x512xbf16>, vector<8x512xf32> -> vector<8x512xf32>
    %239 = arith.addf %236, %238 : vector<8x512xf32>
    %240 = vector.extract_strided_slice %239 {offsets = [0, 0], sizes = [8, 128], strides = [1, 1]} : vector<8x512xf32> to vector<8x128xf32>
    %241 = arith.negf %240 : vector<8x128xf32>
    %242 = math.exp %241 : vector<8x128xf32>
    %cst_51 = arith.constant 1.000000e+00 : f32
    %243 = vector.broadcast %cst_51 : f32 to vector<8x128xf32>
    %244 = arith.addf %243, %242 : vector<8x128xf32>
    %245 = arith.divf %243, %244 : vector<8x128xf32>
    %246 = vector.extract_strided_slice %239 {offsets = [0, 128], sizes = [8, 128], strides = [1, 1]} : vector<8x512xf32> to vector<8x128xf32>
    %247 = arith.negf %246 : vector<8x128xf32>
    %248 = math.exp %247 : vector<8x128xf32>
    %cst_52 = arith.constant 1.000000e+00 : f32
    %249 = vector.broadcast %cst_52 : f32 to vector<8x128xf32>
    %250 = arith.addf %249, %248 : vector<8x128xf32>
    %251 = arith.divf %249, %250 : vector<8x128xf32>
    %252 = vector.extract_strided_slice %239 {offsets = [0, 256], sizes = [8, 128], strides = [1, 1]} : vector<8x512xf32> to vector<8x128xf32>
    %253 = math.tanh %252 : vector<8x128xf32>
    %254 = vector.extract_strided_slice %239 {offsets = [0, 384], sizes = [8, 128], strides = [1, 1]} : vector<8x512xf32> to vector<8x128xf32>
    %255 = arith.negf %254 : vector<8x128xf32>
    %256 = math.exp %255 : vector<8x128xf32>
    %cst_53 = arith.constant 1.000000e+00 : f32
    %257 = vector.broadcast %cst_53 : f32 to vector<8x128xf32>
    %258 = arith.addf %257, %256 : vector<8x128xf32>
    %259 = arith.divf %257, %258 : vector<8x128xf32>
    %260 = arith.mulf %251, %225 : vector<8x128xf32>
    %261 = arith.mulf %245, %253 : vector<8x128xf32>
    %262 = arith.addf %260, %261 : vector<8x128xf32>
    %263 = math.tanh %262 : vector<8x128xf32>
    %264 = arith.mulf %259, %263 : vector<8x128xf32>
    %265 = vector.broadcast %c6_i32 : i32 to vector<8x1xi32>
    %266 = arith.cmpi slt, %265, %8 : vector<8x1xi32>
    %267 = vector.shape_cast %266 : vector<8x1xi1> to vector<8x1xi1>
    %268 = vector.broadcast %267 : vector<8x1xi1> to vector<8x128xi1>
    %269 = arith.select %268, %264, %232 : vector<8x128xi1>, vector<8x128xf32>
    %c7_i32 = arith.constant 7 : i32
    %c8_i32_54 = arith.constant 8 : i32
    %270 = arith.muli %c7_i32, %c8_i32_54 : i32
    %271 = tpu.assume_multiple %270, 8 : i32
    %272 = arith.index_cast %271 : i32 to index
    %c0_55 = arith.constant 0 : index
    %273 = vector.load %arg7[%272, %c0_55] : memref<64x512xf32, #tpu.memory_space<vmem>>, vector<8x512xf32>
    %274 = arith.truncf %269 : vector<8x128xf32> to vector<8x128xbf16>
    %cst_56 = arith.constant dense<0.000000e+00> : vector<8x512xf32>
    %275 = tpu.matmul %274, %7, %cst_56 {dimension_numbers = #tpu.dot_dimension_numbers<[1], [0], [0], [1], [0, 0, 1, 1], [], []>} : vector<8x128xbf16>, vector<128x512xbf16>, vector<8x512xf32> -> vector<8x512xf32>
    %276 = arith.addf %273, %275 : vector<8x512xf32>
    %277 = vector.extract_strided_slice %276 {offsets = [0, 0], sizes = [8, 128], strides = [1, 1]} : vector<8x512xf32> to vector<8x128xf32>
    %278 = arith.negf %277 : vector<8x128xf32>
    %279 = math.exp %278 : vector<8x128xf32>
    %cst_57 = arith.constant 1.000000e+00 : f32
    %280 = vector.broadcast %cst_57 : f32 to vector<8x128xf32>
    %281 = arith.addf %280, %279 : vector<8x128xf32>
    %282 = arith.divf %280, %281 : vector<8x128xf32>
    %283 = vector.extract_strided_slice %276 {offsets = [0, 128], sizes = [8, 128], strides = [1, 1]} : vector<8x512xf32> to vector<8x128xf32>
    %284 = arith.negf %283 : vector<8x128xf32>
    %285 = math.exp %284 : vector<8x128xf32>
    %cst_58 = arith.constant 1.000000e+00 : f32
    %286 = vector.broadcast %cst_58 : f32 to vector<8x128xf32>
    %287 = arith.addf %286, %285 : vector<8x128xf32>
    %288 = arith.divf %286, %287 : vector<8x128xf32>
    %289 = vector.extract_strided_slice %276 {offsets = [0, 256], sizes = [8, 128], strides = [1, 1]} : vector<8x512xf32> to vector<8x128xf32>
    %290 = math.tanh %289 : vector<8x128xf32>
    %291 = vector.extract_strided_slice %276 {offsets = [0, 384], sizes = [8, 128], strides = [1, 1]} : vector<8x512xf32> to vector<8x128xf32>
    %292 = arith.negf %291 : vector<8x128xf32>
    %293 = math.exp %292 : vector<8x128xf32>
    %cst_59 = arith.constant 1.000000e+00 : f32
    %294 = vector.broadcast %cst_59 : f32 to vector<8x128xf32>
    %295 = arith.addf %294, %293 : vector<8x128xf32>
    %296 = arith.divf %294, %295 : vector<8x128xf32>
    %297 = arith.mulf %288, %262 : vector<8x128xf32>
    %298 = arith.mulf %282, %290 : vector<8x128xf32>
    %299 = arith.addf %297, %298 : vector<8x128xf32>
    %300 = math.tanh %299 : vector<8x128xf32>
    %301 = arith.mulf %296, %300 : vector<8x128xf32>
    %302 = vector.broadcast %c7_i32 : i32 to vector<8x1xi32>
    %303 = arith.cmpi slt, %302, %8 : vector<8x1xi32>
    %304 = vector.shape_cast %303 : vector<8x1xi1> to vector<8x1xi1>
    %305 = vector.broadcast %304 : vector<8x1xi1> to vector<8x128xi1>
    %306 = arith.select %305, %301, %269 : vector<8x128xi1>, vector<8x128xf32>
    %c8_i32_60 = arith.constant 8 : i32
    %c0_61 = arith.constant 0 : index
    %c0_62 = arith.constant 0 : index
    %307 = vector.load %arg6[%c0_61, %c0_62] : memref<8x128xf32, #tpu.memory_space<vmem>>, vector<8x128xf32>
    tpu.vector_store %arg6[%c0_61, %c0_62], %306 {strides = array<i32>} : memref<8x128xf32, #tpu.memory_space<vmem>>, vector<8x128xf32>,
    return
  }
  func.func @transform_0(%arg0: i32) -> (i32, i32) {
    %c0_i32 = arith.constant 0 : i32
    %c0_i32_0 = arith.constant 0 : i32
    %c0_i32_1 = arith.constant 0 : i32
    return %c0_i32, %c0_i32_0 : i32, i32
  }
  func.func @transform_1(%arg0: i32) -> (i32, i32) {
    %c0_i32 = arith.constant 0 : i32
    %c0_i32_0 = arith.constant 0 : i32
    %c0_i32_1 = arith.constant 0 : i32
    return %c0_i32, %c0_i32_0 : i32, i32
  }
  func.func @transform_2(%arg0: i32) -> (i32, i32) {
    %c0_i32 = arith.constant 0 : i32
    %c0_i32_0 = arith.constant 0 : i32
    %c0_i32_1 = arith.constant 0 : i32
    return %c0_i32, %c0_i32_0 : i32, i32
  }
  func.func @transform_3(%arg0: i32) -> (i32, i32) {
    %c0_i32 = arith.constant 0 : i32
    %c0_i32_0 = arith.constant 0 : i32
    %c0_i32_1 = arith.constant 0 : i32
    return %c0_i32, %c0_i32_0 : i32, i32
  }
  func.func @transform_4(%arg0: i32) -> (i32, i32) {
    %c0_i32 = arith.constant 0 : i32
    %c0_i32_0 = arith.constant 0 : i32
    %c0_i32_1 = arith.constant 0 : i32
    return %c0_i32, %c0_i32_0 : i32, i32
  }
  func.func @transform_5(%arg0: i32) -> (i32, i32) {
    %c0_i32 = arith.constant 0 : i32
    %c0_i32_0 = arith.constant 0 : i32
    %c0_i32_1 = arith.constant 0 : i32
    return %c0_i32, %c0_i32_0 : i32, i32
  }
}

</mosaic_0001>

<llo_original>
// kernel: tpu_custom_call.1
$region0: #{tpu_custom_call.1}
  #allocation0 [shape = 'u32[]', space=smem, size = 0x4, offset = 0x4, fixed_abs, tag = 'smem constant byte address 0x4 - core index']
  #allocation1 [shape = 'u32[144,128]{1,0:T(1,128)}', space=vmem, size = 0x12000, scoped, tag = 'internal scratch']
  #allocation2 [shape = 'f32[64,512]{1,0:T(8,128)}', space=vmem, size = 0x20000, scoped, tag = 'scratch operand']
  %s0 = inlined_call_operand.vmem [shape: bf16[64,16], index: 0, kind: input, shape index: {}]
  %s1 = inlined_call_operand.vmem [shape: bf16[16,512], index: 1, kind: input, shape index: {}]
  %s2 = inlined_call_operand.hbm [shape: bf16[128,512], index: 2, kind: input, shape index: {}]
  %s3 = inlined_call_operand.vmem [shape: f32[1,512], index: 3, kind: input, shape index: {}]
  %s4 = inlined_call_operand.vmem [shape: s32[8,1], index: 4, kind: input, shape index: {}]
  %s5 = inlined_call_operand.hbm [shape: f32[8,128], index: 5, kind: output, shape index: {}]
  %s6 = sld [smem:[#allocation0]]
  $region34: #{tpu_custom_call.1} parent=0
    _
  %s8 = ssub.s32 1, %s6
  %s9 = scalar_select 0, %s8, %s6
  $region1: #{tpu_custom_call.1} parent=0
    #allocation3 [shape = 'u8[131072]{0}', space=vmem, size = 0x20000, scoped, tag = 'input window, operand 2, single buffered']
    #allocation4 [shape = 's32[1]{0}', space=sflag, size = 0x4, scoped, tag = 'scoped memory for tpu_custom_call.1']
    #allocation5 [shape = 's32[1]{0}', space=sflag, size = 0x4, scoped, tag = 'scoped memory for tpu_custom_call.1']
    #allocation6 [shape = 'u8[4096]{0}', space=vmem, size = 0x1000, scoped, tag = 'output window, operand 0, single buffered']
    %10 = vsyncpa [#allocation4], 0
    %11 = vsyncpa [#allocation5], 0
    // Predicated region
    $region2: #{tpu_custom_call.1} parent=1 // pred_check
      _
    $region3: #{tpu_custom_call.1} parent=1 // pred_check_branch
      %13 = sbr.rel (0) target = $region5
    $region4: #{tpu_custom_call.1} parent=1 // pred_region
      _
    $region5: #{tpu_custom_call.1} parent=1 // pred_fallthru
      _
    // Predicated region
    $region6: #{tpu_custom_call.1} parent=1 // pred_check
      _
    $region7: #{tpu_custom_call.1} parent=1 // pred_check_branch
      %15 = sbr.rel (0) target = $region9
    $region8: #{tpu_custom_call.1} parent=1 // pred_region
      _
    $region9: #{tpu_custom_call.1} parent=1 // pred_fallthru
      _
    // Predicated region
    $region10: #{tpu_custom_call.1} parent=1 // pred_check
      _
    $region11: #{tpu_custom_call.1} parent=1 // pred_check_branch
      %17 = sbr.rel (0) target = $region13
    $region12: #{tpu_custom_call.1} parent=1 // pred_region
      %s19 = ssub.s32 4096, 4096
      %20 = vsyncadd [#allocation4], %s19
      %s21 = sshll.u32 [#allocation3], 4
      %s22 = int_to_ptr.vmem [resolvable:$true] %s21
      %27 = dma.hbm_to_vmem [thread:$0]  %s2, 4096, %s22, [#allocation4], 256, 256, 16
    $region13: #{tpu_custom_call.1} parent=1 // pred_fallthru
      _
    // Predicated region
    $region14: #{tpu_custom_call.1} parent=1 // pred_check
      _
    $region15: #{tpu_custom_call.1} parent=1 // pred_check_branch
      %29 = sbr.rel (0) target = $region17
    $region16: #{tpu_custom_call.1} parent=1 // pred_region
      _
    $region17: #{tpu_custom_call.1} parent=1 // pred_fallthru
      _
    // Predicated region
    $region18: #{tpu_custom_call.1} parent=1 // pred_check
      _
    $region19: #{tpu_custom_call.1} parent=1 // pred_check_branch
      %31 = sbr.rel (0) target = $region21
    $region20: #{tpu_custom_call.1} parent=1 // pred_region
      _
    $region21: #{tpu_custom_call.1} parent=1 // pred_fallthru
      _
    // Predicated region
    $region22: #{tpu_custom_call.1} parent=1 // pred_check
      _
    $region23: #{tpu_custom_call.1} parent=1 // pred_check_branch
      %33 = sbr.rel (0) target = $region25
    $region24: #{tpu_custom_call.1} parent=1 // pred_region
      %34 = dma.done [#allocation4], 4096
    $region25: #{tpu_custom_call.1} parent=1 // pred_fallthru
      _
    %v36 = vld [vmem:[%s0] sm:$0xf]
    %v37 = vld [vmem:[%s0 + $0x4] sm:$0xf]
    %v38 = vld [vmem:[%s0 + $0x8] sm:$0xf]
    %v39 = vld [vmem:[%s0 + $0xc] sm:$0xf]
    %v40 = vld [vmem:[%s0 + $0x10] sm:$0xf]
    %v41 = vld [vmem:[%s0 + $0x14] sm:$0xf]
    %v42 = vld [vmem:[%s0 + $0x18] sm:$0xf]
    %v43 = vld [vmem:[%s0 + $0x1c] sm:$0xf]
    %v44 = vld [vmem:[%s1] sm:$0xff]
    %v45 = vld [vmem:[%s1 + $0x8] sm:$0xff]
    %v46 = vld [vmem:[%s1 + $0x10] sm:$0xff]
    %v47 = vld [vmem:[%s1 + $0x18] sm:$0xff]
    %v48 = vld [vmem:[%s3] sm:$0xf]
    %v50 = vlaneseq
    %v51 = vshrl.u32 %v50, 7
    %v52 = vsub.s32 0, %v51
    %v53 = vrot.slane %v48, %v52
    %v54 = vlaneseq
    %v55 = vshrl.u32 %v54, 7
    %v56 = vsub.s32 1, %v55
    %v57 = vrot.slane %v48, %v56
    %v58 = vlaneseq
    %v59 = vshrl.u32 %v58, 7
    %v60 = vsub.s32 2, %v59
    %v61 = vrot.slane %v48, %v60
    %v62 = vlaneseq
    %v63 = vshrl.u32 %v62, 7
    %v64 = vsub.s32 3, %v63
    %v65 = vrot.slane %v48, %v64
    %v78 = vunpack.c.l.b16 %v36
    %v79 = vunpack.c.l.b16 %v37
    %v80 = vunpack.c.l.b16 %v38
    %v81 = vunpack.c.l.b16 %v39
    %v82 = vunpack.c.l.b16 %v40
    %v83 = vunpack.c.l.b16 %v41
    %v84 = vunpack.c.l.b16 %v42
    %v85 = vunpack.c.l.b16 %v43
    %v86 = vpack.c.b16 %v79, %v78
    %v87 = vpack.c.b16 %v81, %v80
    %v88 = vpack.c.b16 %v83, %v82
    %v89 = vpack.c.b16 %v85, %v84
    %v94 = vunpack.c.l.b16 %v44
    %v95 = vunpack.c.h.b16 %v44
    %v96 = vunpack.c.l.b16 %v45
    %v97 = vunpack.c.h.b16 %v45
    %v98 = vunpack.c.l.b16 %v46
    %v99 = vunpack.c.h.b16 %v46
    %v100 = vunpack.c.l.b16 %v47
    %v101 = vunpack.c.h.b16 %v47
    %v102 = vpack.c.b16 %v98, %v94
    %v103 = vpack.c.b16 %v99, %v95
    %v104 = vpack.c.b16 %v100, %v96
    %v105 = vpack.c.b16 %v101, %v97
    %vm110 = vcmask 130048
    %v112 = vsel %vm110, %v86, 0
    %v115 = vsel %vm110, %v87, 0
    %v118 = vsel %vm110, %v88, 0
    %v121 = vsel %vm110, %v89, 0
    %123 = vmatprep.subr.bf16.mxu0 0
    %124 = vmatpush1.bf16.msra.mxu0 0
    %125 = vmatprep.subr.bf16.mxu0 0
    %126 = vmatpush1.bf16.msra.mxu0 0
    %127 = vmatprep.subr.bf16.mxu0 0
    %128 = vmatpush1.bf16.msra.mxu0 0
    %129 = vmatprep.subr.bf16.mxu0 0
    %130 = vmatpush1.bf16.msra.mxu0 0
    %131 = vmatprep.subr.bf16.mxu0 0
    %132 = vmatpush1.bf16.msra.mxu0 0
    %133 = vmatprep.subr.bf16.mxu0 0
    %134 = vmatpush1.bf16.msra.mxu0 0
    %135 = vmatprep.subr.bf16.mxu0 0
    %136 = vmatpush1.bf16.msra.mxu0 0
    %137 = vmatprep.subr.bf16.mxu0 %v103
    %138 = vmatpush1.bf16.msra.mxu0 %v102
    %139 = vmatprep.subr.bf16.mxu0 0
    %140 = vmatpush2.bf16.msra.mxu0 0
    %141 = vmatprep.subr.bf16.mxu0 0
    %142 = vmatpush2.bf16.msra.mxu0 0
    %143 = vmatprep.subr.bf16.mxu0 0
    %144 = vmatpush2.bf16.msra.mxu0 0
    %145 = vmatprep.subr.bf16.mxu0 0
    %146 = vmatpush2.bf16.msra.mxu0 0
    %147 = vmatprep.subr.bf16.mxu0 0
    %148 = vmatpush2.bf16.msra.mxu0 0
    %149 = vmatprep.subr.bf16.mxu0 0
    %150 = vmatpush2.bf16.msra.mxu0 0
    %151 = vmatprep.subr.bf16.mxu0 0
    %152 = vmatpush2.bf16.msra.mxu0 0
    %153 = vmatprep.subr.bf16.mxu0 0
    %154 = vmatpush2.bf16.msra.mxu0 0
    %155 = vmatprep.mubr.bf16.mxu0 0
    %156 = vmatmul.mubr.bf16.gmra.mxu0 %v112
    %v157 = vpop.f32.mrf.mxu0
    %v158 = vadd.f32 %v53, %v157
    %v159 = vpop.f32.mrf.mxu0
    %v160 = vadd.f32 %v57, %v159
    %v161 = vpop.f32.mrf.mxu0
    %v162 = vadd.f32 %v53, %v161
    %v163 = vpop.f32.mrf.mxu0
    %v164 = vadd.f32 %v57, %v163
    %165 = vmatprep.mubr.bf16.mxu0 0
    %166 = vmatmul.mubr.bf16.gmra.mxu0 %v115
    %v167 = vpop.f32.mrf.mxu0
    %v168 = vadd.f32 %v53, %v167
    %v169 = vpop.f32.mrf.mxu0
    %v170 = vadd.f32 %v57, %v169
    %v171 = vpop.f32.mrf.mxu0
    %v172 = vadd.f32 %v53, %v171
    %v173 = vpop.f32.mrf.mxu0
    %v174 = vadd.f32 %v57, %v173
    %175 = vmatprep.mubr.bf16.mxu0 0
    %176 = vmatmul.mubr.bf16.gmra.mxu0 %v118
    %v177 = vpop.f32.mrf.mxu0
    %v178 = vadd.f32 %v53, %v177
    %v179 = vpop.f32.mrf.mxu0
    %v180 = vadd.f32 %v57, %v179
    %v181 = vpop.f32.mrf.mxu0
    %v182 = vadd.f32 %v53, %v181
    %v183 = vpop.f32.mrf.mxu0
    %v184 = vadd.f32 %v57, %v183
    %185 = vmatprep.mubr.bf16.mxu0 0
    %186 = vmatmul.mubr.bf16.gmra.mxu0 %v121
    %v187 = vpop.f32.mrf.mxu0
    %v188 = vadd.f32 %v53, %v187
    %v189 = vpop.f32.mrf.mxu0
    %v190 = vadd.f32 %v57, %v189
    %v191 = vpop.f32.mrf.mxu0
    %v192 = vadd.f32 %v53, %v191
    %v193 = vpop.f32.mrf.mxu0
    %v194 = vadd.f32 %v57, %v193
    %195 = vdwg.mxu0
    %196 = vmatprep.subr.bf16.mxu0 0
    %197 = vmatpush1.bf16.msra.mxu0 0
    %198 = vmatprep.subr.bf16.mxu0 0
    %199 = vmatpush1.bf16.msra.mxu0 0
    %200 = vmatprep.subr.bf16.mxu0 0
    %201 = vmatpush1.bf16.msra.mxu0 0
    %202 = vmatprep.subr.bf16.mxu0 0
    %203 = vmatpush1.bf16.msra.mxu0 0
    %204 = vmatprep.subr.bf16.mxu0 0
    %205 = vmatpush1.bf16.msra.mxu0 0
    %206 = vmatprep.subr.bf16.mxu0 0
    %207 = vmatpush1.bf16.msra.mxu0 0
    %208 = vmatprep.subr.bf16.mxu0 0
    %209 = vmatpush1.bf16.msra.mxu0 0
    %210 = vmatprep.subr.bf16.mxu0 %v105
    %211 = vmatpush1.bf16.msra.mxu0 %v104
    %212 = vmatprep.subr.bf16.mxu0 0
    %213 = vmatpush2.bf16.msra.mxu0 0
    %214 = vmatprep.subr.bf16.mxu0 0
    %215 = vmatpush2.bf16.msra.mxu0 0
    %216 = vmatprep.subr.bf16.mxu0 0
    %217 = vmatpush2.bf16.msra.mxu0 0
    %218 = vmatprep.subr.bf16.mxu0 0
    %219 = vmatpush2.bf16.msra.mxu0 0
    %220 = vmatprep.subr.bf16.mxu0 0
    %221 = vmatpush2.bf16.msra.mxu0 0
    %222 = vmatprep.subr.bf16.mxu0 0
    %223 = vmatpush2.bf16.msra.mxu0 0
    %224 = vmatprep.subr.bf16.mxu0 0
    %225 = vmatpush2.bf16.msra.mxu0 0
    %226 = vmatprep.subr.bf16.mxu0 0
    %227 = vmatpush2.bf16.msra.mxu0 0
    %228 = vmatprep.mubr.bf16.mxu0 0
    %229 = vmatmul.mubr.bf16.gmra.mxu0 %v112
    %v230 = vpop.f32.mrf.mxu0
    %v231 = vadd.f32 %v61, %v230
    %v232 = vpop.f32.mrf.mxu0
    %v233 = vadd.f32 %v65, %v232
    %v234 = vpop.f32.mrf.mxu0
    %v235 = vadd.f32 %v61, %v234
    %v236 = vpop.f32.mrf.mxu0
    %v237 = vadd.f32 %v65, %v236
    %238 = vmatprep.mubr.bf16.mxu0 0
    %239 = vmatmul.mubr.bf16.gmra.mxu0 %v115
    %v240 = vpop.f32.mrf.mxu0
    %v241 = vadd.f32 %v61, %v240
    %v242 = vpop.f32.mrf.mxu0
    %v243 = vadd.f32 %v65, %v242
    %v244 = vpop.f32.mrf.mxu0
    %v245 = vadd.f32 %v61, %v244
    %v246 = vpop.f32.mrf.mxu0
    %v247 = vadd.f32 %v65, %v246
    %248 = vmatprep.mubr.bf16.mxu0 0
    %249 = vmatmul.mubr.bf16.gmra.mxu0 %v118
    %v250 = vpop.f32.mrf.mxu0
    %v251 = vadd.f32 %v61, %v250
    %v252 = vpop.f32.mrf.mxu0
    %v253 = vadd.f32 %v65, %v252
    %v254 = vpop.f32.mrf.mxu0
    %v255 = vadd.f32 %v61, %v254
    %v256 = vpop.f32.mrf.mxu0
    %v257 = vadd.f32 %v65, %v256
    %258 = vmatprep.mubr.bf16.mxu0 0
    %259 = vmatmul.mubr.bf16.gmra.mxu0 %v121
    %v260 = vpop.f32.mrf.mxu0
    %v261 = vadd.f32 %v61, %v260
    %v262 = vpop.f32.mrf.mxu0
    %v263 = vadd.f32 %v65, %v262
    %v264 = vpop.f32.mrf.mxu0
    %v265 = vadd.f32 %v61, %v264
    %v266 = vpop.f32.mrf.mxu0
    %v267 = vadd.f32 %v65, %v266
    %268 = vdwg.mxu0
    %269 = vst [vmem:[#allocation2] sm:$0xff] %v158
    %270 = vst [vmem:[#allocation2 + $0x8] sm:$0xff] %v160
    %271 = vst [vmem:[#allocation2 + $0x10] sm:$0xff] %v231
    %272 = vst [vmem:[#allocation2 + $0x18] sm:$0xff] %v233
    %273 = vst [vmem:[#allocation2 + $0x20] sm:$0xff] %v162
    %274 = vst [vmem:[#allocation2 + $0x28] sm:$0xff] %v164
    %275 = vst [vmem:[#allocation2 + $0x30] sm:$0xff] %v235
    %276 = vst [vmem:[#allocation2 + $0x38] sm:$0xff] %v237
    %277 = vst [vmem:[#allocation2 + $0x40] sm:$0xff] %v168
    %278 = vst [vmem:[#allocation2 + $0x48] sm:$0xff] %v170
    %279 = vst [vmem:[#allocation2 + $0x50] sm:$0xff] %v241
    %280 = vst [vmem:[#allocation2 + $0x58] sm:$0xff] %v243
    %281 = vst [vmem:[#allocation2 + $0x60] sm:$0xff] %v172
    %282 = vst [vmem:[#allocation2 + $0x68] sm:$0xff] %v174
    %283 = vst [vmem:[#allocation2 + $0x70] sm:$0xff] %v245
    %284 = vst [vmem:[#allocation2 + $0x78] sm:$0xff] %v247
    %285 = vst [vmem:[#allocation2 + $0x80] sm:$0xff] %v178
    %286 = vst [vmem:[#allocation2 + $0x88] sm:$0xff] %v180
    %287 = vst [vmem:[#allocation2 + $0x90] sm:$0xff] %v251
    %288 = vst [vmem:[#allocation2 + $0x98] sm:$0xff] %v253
    %289 = vst [vmem:[#allocation2 + $0xa0] sm:$0xff] %v182
    %290 = vst [vmem:[#allocation2 + $0xa8] sm:$0xff] %v184
    %291 = vst [vmem:[#allocation2 + $0xb0] sm:$0xff] %v255
    %292 = vst [vmem:[#allocation2 + $0xb8] sm:$0xff] %v257
    %293 = vst [vmem:[#allocation2 + $0xc0] sm:$0xff] %v188
    %294 = vst [vmem:[#allocation2 + $0xc8] sm:$0xff] %v190
    %295 = vst [vmem:[#allocation2 + $0xd0] sm:$0xff] %v261
    %296 = vst [vmem:[#allocation2 + $0xd8] sm:$0xff] %v263
    %297 = vst [vmem:[#allocation2 + $0xe0] sm:$0xff] %v192
    %298 = vst [vmem:[#allocation2 + $0xe8] sm:$0xff] %v194
    %299 = vst [vmem:[#allocation2 + $0xf0] sm:$0xff] %v265
    %300 = vst [vmem:[#allocation2 + $0xf8] sm:$0xff] %v267
    %v301 = vld [vmem:[#allocation3] sm:$0xff]
    %v302 = vld [vmem:[#allocation3 + $0x8] sm:$0xff]
    %v303 = vld [vmem:[#allocation3 + $0x10] sm:$0xff]
    %v304 = vld [vmem:[#allocation3 + $0x18] sm:$0xff]
    %v305 = vld [vmem:[#allocation3 + $0x20] sm:$0xff]
    %v306 = vld [vmem:[#allocation3 + $0x28] sm:$0xff]
    %v307 = vld [vmem:[#allocation3 + $0x30] sm:$0xff]
    %v308 = vld [vmem:[#allocation3 + $0x38] sm:$0xff]
    %v309 = vld [vmem:[#allocation3 + $0x40] sm:$0xff]
    %v310 = vld [vmem:[#allocation3 + $0x48] sm:$0xff]
    %v311 = vld [vmem:[#allocation3 + $0x50] sm:$0xff]
    %v312 = vld [vmem:[#allocation3 + $0x58] sm:$0xff]
    %v313 = vld [vmem:[#allocation3 + $0x60] sm:$0xff]
    %v314 = vld [vmem:[#allocation3 + $0x68] sm:$0xff]
    %v315 = vld [vmem:[#allocation3 + $0x70] sm:$0xff]
    %v316 = vld [vmem:[#allocation3 + $0x78] sm:$0xff]
    %v317 = vld [vmem:[#allocation3 + $0x80] sm:$0xff]
    %v318 = vld [vmem:[#allocation3 + $0x88] sm:$0xff]
    %v319 = vld [vmem:[#allocation3 + $0x90] sm:$0xff]
    %v320 = vld [vmem:[#allocation3 + $0x98] sm:$0xff]
    %v321 = vld [vmem:[#allocation3 + $0xa0] sm:$0xff]
    %v322 = vld [vmem:[#allocation3 + $0xa8] sm:$0xff]
    %v323 = vld [vmem:[#allocation3 + $0xb0] sm:$0xff]
    %v324 = vld [vmem:[#allocation3 + $0xb8] sm:$0xff]
    %v325 = vld [vmem:[#allocation3 + $0xc0] sm:$0xff]
    %v326 = vld [vmem:[#allocation3 + $0xc8] sm:$0xff]
    %v327 = vld [vmem:[#allocation3 + $0xd0] sm:$0xff]
    %v328 = vld [vmem:[#allocation3 + $0xd8] sm:$0xff]
    %v329 = vld [vmem:[#allocation3 + $0xe0] sm:$0xff]
    %v330 = vld [vmem:[#allocation3 + $0xe8] sm:$0xff]
    %v331 = vld [vmem:[#allocation3 + $0xf0] sm:$0xff]
    %v332 = vld [vmem:[#allocation3 + $0xf8] sm:$0xff]
    %v333 = vld [vmem:[%s4] sm:$0xff]
    %s334 = smul.u32 0, 4
    %s335 = smul.addr %s334, 8
    %s336 = scalar_lea.vmem [#allocation2], %s335
    %v337 = vld [vmem:[%s336] sm:$0xff]
    %v338 = vld [vmem:[%s336 + $0x8] sm:$0xff]
    %v339 = vld [vmem:[%s336 + $0x10] sm:$0xff]
    %v340 = vld [vmem:[%s336 + $0x18] sm:$0xff]
    %v373 = vunpack.c.l.b16 %v301
    %v374 = vunpack.c.h.b16 %v301
    %v375 = vunpack.c.l.b16 %v302
    %v376 = vunpack.c.h.b16 %v302
    %v377 = vunpack.c.l.b16 %v303
    %v378 = vunpack.c.h.b16 %v303
    %v379 = vunpack.c.l.b16 %v304
    %v380 = vunpack.c.h.b16 %v304
    %v381 = vunpack.c.l.b16 %v305
    %v382 = vunpack.c.h.b16 %v305
    %v383 = vunpack.c.l.b16 %v306
    %v384 = vunpack.c.h.b16 %v306
    %v385 = vunpack.c.l.b16 %v307
    %v386 = vunpack.c.h.b16 %v307
    %v387 = vunpack.c.l.b16 %v308
    %v388 = vunpack.c.h.b16 %v308
    %v389 = vunpack.c.l.b16 %v309
    %v390 = vunpack.c.h.b16 %v309
    %v391 = vunpack.c.l.b16 %v310
    %v392 = vunpack.c.h.b16 %v310
    %v393 = vunpack.c.l.b16 %v311
    %v394 = vunpack.c.h.b16 %v311
    %v395 = vunpack.c.l.b16 %v312
    %v396 = vunpack.c.h.b16 %v312
    %v397 = vunpack.c.l.b16 %v313
    %v398 = vunpack.c.h.b16 %v313
    %v399 = vunpack.c.l.b16 %v314
    %v400 = vunpack.c.h.b16 %v314
    %v401 = vunpack.c.l.b16 %v315
    %v402 = vunpack.c.h.b16 %v315
    %v403 = vunpack.c.l.b16 %v316
    %v404 = vunpack.c.h.b16 %v316
    %v405 = vunpack.c.l.b16 %v317
    %v406 = vunpack.c.h.b16 %v317
    %v407 = vunpack.c.l.b16 %v318
    %v408 = vunpack.c.h.b16 %v318
    %v409 = vunpack.c.l.b16 %v319
    %v410 = vunpack.c.h.b16 %v319
    %v411 = vunpack.c.l.b16 %v320
    %v412 = vunpack.c.h.b16 %v320
    %v413 = vunpack.c.l.b16 %v321
    %v414 = vunpack.c.h.b16 %v321
    %v415 = vunpack.c.l.b16 %v322
    %v416 = vunpack.c.h.b16 %v322
    %v417 = vunpack.c.l.b16 %v323
    %v418 = vunpack.c.h.b16 %v323
    %v419 = vunpack.c.l.b16 %v324
    %v420 = vunpack.c.h.b16 %v324
    %v421 = vunpack.c.l.b16 %v325
    %v422 = vunpack.c.h.b16 %v325
    %v423 = vunpack.c.l.b16 %v326
    %v424 = vunpack.c.h.b16 %v326
    %v425 = vunpack.c.l.b16 %v327
    %v426 = vunpack.c.h.b16 %v327
    %v427 = vunpack.c.l.b16 %v328
    %v428 = vunpack.c.h.b16 %v328
    %v429 = vunpack.c.l.b16 %v329
    %v430 = vunpack.c.h.b16 %v329
    %v431 = vunpack.c.l.b16 %v330
    %v432 = vunpack.c.h.b16 %v330
    %v433 = vunpack.c.l.b16 %v331
    %v434 = vunpack.c.h.b16 %v331
    %v435 = vunpack.c.l.b16 %v332
    %v436 = vunpack.c.h.b16 %v332
    %v437 = vpack.c.b16 %v377, %v373
    %v438 = vpack.c.b16 %v378, %v374
    %v439 = vpack.c.b16 %v379, %v375
    %v440 = vpack.c.b16 %v380, %v376
    %v441 = vpack.c.b16 %v385, %v381
    %v442 = vpack.c.b16 %v386, %v382
    %v443 = vpack.c.b16 %v387, %v383
    %v444 = vpack.c.b16 %v388, %v384
    %v445 = vpack.c.b16 %v393, %v389
    %v446 = vpack.c.b16 %v394, %v390
    %v447 = vpack.c.b16 %v395, %v391
    %v448 = vpack.c.b16 %v396, %v392
    %v449 = vpack.c.b16 %v401, %v397
    %v450 = vpack.c.b16 %v402, %v398
    %v451 = vpack.c.b16 %v403, %v399
    %v452 = vpack.c.b16 %v404, %v400
    %v453 = vpack.c.b16 %v409, %v405
    %v454 = vpack.c.b16 %v410, %v406
    %v455 = vpack.c.b16 %v411, %v407
    %v456 = vpack.c.b16 %v412, %v408
    %v457 = vpack.c.b16 %v417, %v413
    %v458 = vpack.c.b16 %v418, %v414
    %v459 = vpack.c.b16 %v419, %v415
    %v460 = vpack.c.b16 %v420, %v416
    %v461 = vpack.c.b16 %v425, %v421
    %v462 = vpack.c.b16 %v426, %v422
    %v463 = vpack.c.b16 %v427, %v423
    %v464 = vpack.c.b16 %v428, %v424
    %v465 = vpack.c.b16 %v433, %v429
    %v466 = vpack.c.b16 %v434, %v430
    %v467 = vpack.c.b16 %v435, %v431
    %v468 = vpack.c.b16 %v436, %v432
    %501 = vmatprep.subr.bf16.mxu0 %v466
    %502 = vmatpush1.bf16.msra.mxu0 %v465
    %503 = vmatprep.subr.bf16.mxu0 %v462
    %504 = vmatpush1.bf16.msra.mxu0 %v461
    %505 = vmatprep.subr.bf16.mxu0 %v458
    %506 = vmatpush1.bf16.msra.mxu0 %v457
    %507 = vmatprep.subr.bf16.mxu0 %v454
    %508 = vmatpush1.bf16.msra.mxu0 %v453
    %509 = vmatprep.subr.bf16.mxu0 %v450
    %510 = vmatpush1.bf16.msra.mxu0 %v449
    %511 = vmatprep.subr.bf16.mxu0 %v446
    %512 = vmatpush1.bf16.msra.mxu0 %v445
    %513 = vmatprep.subr.bf16.mxu0 %v442
    %514 = vmatpush1.bf16.msra.mxu0 %v441
    %515 = vmatprep.subr.bf16.mxu0 %v438
    %516 = vmatpush1.bf16.msra.mxu0 %v437
    %517 = vmatprep.subr.bf16.mxu0 0
    %518 = vmatpush2.bf16.msra.mxu0 0
    %519 = vmatprep.subr.bf16.mxu0 0
    %520 = vmatpush2.bf16.msra.mxu0 0
    %521 = vmatprep.subr.bf16.mxu0 0
    %522 = vmatpush2.bf16.msra.mxu0 0
    %523 = vmatprep.subr.bf16.mxu0 0
    %524 = vmatpush2.bf16.msra.mxu0 0
    %525 = vmatprep.subr.bf16.mxu0 0
    %526 = vmatpush2.bf16.msra.mxu0 0
    %527 = vmatprep.subr.bf16.mxu0 0
    %528 = vmatpush2.bf16.msra.mxu0 0
    %529 = vmatprep.subr.bf16.mxu0 0
    %530 = vmatpush2.bf16.msra.mxu0 0
    %531 = vmatprep.subr.bf16.mxu0 0
    %532 = vmatpush2.bf16.msra.mxu0 0
    %533 = vmatprep.mubr.bf16.mxu0 0
    %534 = vmatmul.mubr.bf16.gmra.mxu0 0
    %v535 = vpop.f32.mrf.mxu0
    %v536 = vadd.f32 0.0, %v535
    %v537 = vpop.f32.mrf.mxu0
    %v538 = vadd.f32 0.0, %v537
    %v539 = vpop.f32.mrf.mxu0
    %v540 = vpop.f32.mrf.mxu0
    %541 = vdwg.mxu0
    %542 = vmatprep.subr.bf16.mxu0 %v468
    %543 = vmatpush1.bf16.msra.mxu0 %v467
    %544 = vmatprep.subr.bf16.mxu0 %v464
    %545 = vmatpush1.bf16.msra.mxu0 %v463
    %546 = vmatprep.subr.bf16.mxu0 %v460
    %547 = vmatpush1.bf16.msra.mxu0 %v459
    %548 = vmatprep.subr.bf16.mxu0 %v456
    %549 = vmatpush1.bf16.msra.mxu0 %v455
    %550 = vmatprep.subr.bf16.mxu0 %v452
    %551 = vmatpush1.bf16.msra.mxu0 %v451
    %552 = vmatprep.subr.bf16.mxu0 %v448
    %553 = vmatpush1.bf16.msra.mxu0 %v447
    %554 = vmatprep.subr.bf16.mxu0 %v444
    %555 = vmatpush1.bf16.msra.mxu0 %v443
    %556 = vmatprep.subr.bf16.mxu0 %v440
    %557 = vmatpush1.bf16.msra.mxu0 %v439
    %558 = vmatprep.subr.bf16.mxu0 0
    %559 = vmatpush2.bf16.msra.mxu0 0
    %560 = vmatprep.subr.bf16.mxu0 0
    %561 = vmatpush2.bf16.msra.mxu0 0
    %562 = vmatprep.subr.bf16.mxu0 0
    %563 = vmatpush2.bf16.msra.mxu0 0
    %564 = vmatprep.subr.bf16.mxu0 0
    %565 = vmatpush2.bf16.msra.mxu0 0
    %566 = vmatprep.subr.bf16.mxu0 0
    %567 = vmatpush2.bf16.msra.mxu0 0
    %568 = vmatprep.subr.bf16.mxu0 0
    %569 = vmatpush2.bf16.msra.mxu0 0
    %570 = vmatprep.subr.bf16.mxu0 0
    %571 = vmatpush2.bf16.msra.mxu0 0
    %572 = vmatprep.subr.bf16.mxu0 0
    %573 = vmatpush2.bf16.msra.mxu0 0
    %574 = vmatprep.mubr.bf16.mxu0 0
    %575 = vmatmul.mubr.bf16.gmra.mxu0 0
    %v576 = vpop.f32.mrf.mxu0
    %v577 = vadd.f32 0.0, %v576
    %v578 = vpop.f32.mrf.mxu0
    %v579 = vadd.f32 0.0, %v578
    %v580 = vpop.f32.mrf.mxu0
    %v581 = vpop.f32.mrf.mxu0
    %582 = vdwg.mxu0
    %v583 = vadd.f32 %v337, %v536
    %v584 = vadd.f32 %v338, %v538
    %v585 = vadd.f32 %v339, %v577
    %v586 = vadd.f32 %v340, %v579
    %v587 = vxor.u32 %v583, 2147483648
    %v588 = vmul.f32 %v587, 1.442695
    %v589 = vpow.pop %v588
    %v590 = vadd.f32 %v589, 1.0
    %v591 = vrcp.pop %v590
    %v592 = vmul.f32 1.0, %v591
    %v593 = vxor.u32 %v584, 2147483648
    %v594 = vmul.f32 %v593, 1.442695
    %v595 = vpow.pop %v594
    %v596 = vadd.f32 %v595, 1.0
    %v597 = vrcp.pop %v596
    %v598 = vmul.f32 1.0, %v597
    %v599 = vtanh.pop %v585
    %v600 = vxor.u32 %v586, 2147483648
    %v601 = vmul.f32 %v600, 1.442695
    %v602 = vpow.pop %v601
    %v603 = vadd.f32 %v602, 1.0
    %v604 = vrcp.pop %v603
    %v605 = vmul.f32 1.0, %v604
    %v606 = vmul.f32 %v598, 0.0
    %v607 = vmul.f32 %v592, %v599
    %v608 = vadd.f32 %v606, %v607
    %v609 = vtanh.pop %v608
    %v610 = vmul.f32 %v605, %v609
    %vm611 = vcmp.gt.s32.totalorder %v333, 0
    %v612 = vsel %vm611, 1, 0
    %613 = vset.pattern.permute.xlu0 0
    %614 = vperm.xlu0 %613, %v612
    %v615 = vpop.permute.xlu0 %614
    %vm616 = vcmp.eq.s32.totalorder %v615, 1
    %v617 = vsel %vm616, %v610, 0.0
    %s618 = smul.u32 1, 4
    %s619 = smul.addr %s618, 8
    %s620 = scalar_lea.vmem [#allocation2], %s619
    %v621 = vld [vmem:[%s620] sm:$0xff]
    %v622 = vld [vmem:[%s620 + $0x8] sm:$0xff]
    %v623 = vld [vmem:[%s620 + $0x10] sm:$0xff]
    %v624 = vld [vmem:[%s620 + $0x18] sm:$0xff]
    %v625 = vpack.c.bf16 %v617, %v617
    %626 = vmatprep.subr.bf16.mxu0 %v466
    %627 = vmatpush1.bf16.msra.mxu0 %v465
    %628 = vmatprep.subr.bf16.mxu0 %v462
    %629 = vmatpush1.bf16.msra.mxu0 %v461
    %630 = vmatprep.subr.bf16.mxu0 %v458
    %631 = vmatpush1.bf16.msra.mxu0 %v457
    %632 = vmatprep.subr.bf16.mxu0 %v454
    %633 = vmatpush1.bf16.msra.mxu0 %v453
    %634 = vmatprep.subr.bf16.mxu0 %v450
    %635 = vmatpush1.bf16.msra.mxu0 %v449
    %636 = vmatprep.subr.bf16.mxu0 %v446
    %637 = vmatpush1.bf16.msra.mxu0 %v445
    %638 = vmatprep.subr.bf16.mxu0 %v442
    %639 = vmatpush1.bf16.msra.mxu0 %v441
    %640 = vmatprep.subr.bf16.mxu0 %v438
    %641 = vmatpush1.bf16.msra.mxu0 %v437
    %642 = vmatprep.subr.bf16.mxu0 0
    %643 = vmatpush2.bf16.msra.mxu0 0
    %644 = vmatprep.subr.bf16.mxu0 0
    %645 = vmatpush2.bf16.msra.mxu0 0
    %646 = vmatprep.subr.bf16.mxu0 0
    %647 = vmatpush2.bf16.msra.mxu0 0
    %648 = vmatprep.subr.bf16.mxu0 0
    %649 = vmatpush2.bf16.msra.mxu0 0
    %650 = vmatprep.subr.bf16.mxu0 0
    %651 = vmatpush2.bf16.msra.mxu0 0
    %652 = vmatprep.subr.bf16.mxu0 0
    %653 = vmatpush2.bf16.msra.mxu0 0
    %654 = vmatprep.subr.bf16.mxu0 0
    %655 = vmatpush2.bf16.msra.mxu0 0
    %656 = vmatprep.subr.bf16.mxu0 0
    %657 = vmatpush2.bf16.msra.mxu0 0
    %658 = vmatprep.mubr.bf16.mxu0 0
    %659 = vmatmul.mubr.bf16.gmra.mxu0 %v625
    %v660 = vpop.f32.mrf.mxu0
    %v661 = vadd.f32 0.0, %v660
    %v662 = vpop.f32.mrf.mxu0
    %v663 = vadd.f32 0.0, %v662
    %v664 = vpop.f32.mrf.mxu0
    %v665 = vpop.f32.mrf.mxu0
    %666 = vdwg.mxu0
    %667 = vmatprep.subr.bf16.mxu0 %v468
    %668 = vmatpush1.bf16.msra.mxu0 %v467
    %669 = vmatprep.subr.bf16.mxu0 %v464
    %670 = vmatpush1.bf16.msra.mxu0 %v463
    %671 = vmatprep.subr.bf16.mxu0 %v460
    %672 = vmatpush1.bf16.msra.mxu0 %v459
    %673 = vmatprep.subr.bf16.mxu0 %v456
    %674 = vmatpush1.bf16.msra.mxu0 %v455
    %675 = vmatprep.subr.bf16.mxu0 %v452
    %676 = vmatpush1.bf16.msra.mxu0 %v451
    %677 = vmatprep.subr.bf16.mxu0 %v448
    %678 = vmatpush1.bf16.msra.mxu0 %v447
    %679 = vmatprep.subr.bf16.mxu0 %v444
    %680 = vmatpush1.bf16.msra.mxu0 %v443
    %681 = vmatprep.subr.bf16.mxu0 %v440
    %682 = vmatpush1.bf16.msra.mxu0 %v439
    %683 = vmatprep.subr.bf16.mxu0 0
    %684 = vmatpush2.bf16.msra.mxu0 0
    %685 = vmatprep.subr.bf16.mxu0 0
    %686 = vmatpush2.bf16.msra.mxu0 0
    %687 = vmatprep.subr.bf16.mxu0 0
    %688 = vmatpush2.bf16.msra.mxu0 0
    %689 = vmatprep.subr.bf16.mxu0 0
    %690 = vmatpush2.bf16.msra.mxu0 0
    %691 = vmatprep.subr.bf16.mxu0 0
    %692 = vmatpush2.bf16.msra.mxu0 0
    %693 = vmatprep.subr.bf16.mxu0 0
    %694 = vmatpush2.bf16.msra.mxu0 0
    %695 = vmatprep.subr.bf16.mxu0 0
    %696 = vmatpush2.bf16.msra.mxu0 0
    %697 = vmatprep.subr.bf16.mxu0 0
    %698 = vmatpush2.bf16.msra.mxu0 0
    %699 = vmatprep.mubr.bf16.mxu0 0
    %700 = vmatmul.mubr.bf16.gmra.mxu0 %v625
    %v701 = vpop.f32.mrf.mxu0
    %v702 = vadd.f32 0.0, %v701
    %v703 = vpop.f32.mrf.mxu0
    %v704 = vadd.f32 0.0, %v703
    %v705 = vpop.f32.mrf.mxu0
    %v706 = vpop.f32.mrf.mxu0
    %707 = vdwg.mxu0
    %v708 = vadd.f32 %v621, %v661
    %v709 = vadd.f32 %v622, %v663
    %v710 = vadd.f32 %v623, %v702
    %v711 = vadd.f32 %v624, %v704
    %v712 = vxor.u32 %v708, 2147483648
    %v713 = vmul.f32 %v712, 1.442695
    %v714 = vpow.pop %v713
    %v715 = vadd.f32 %v714, 1.0
    %v716 = vrcp.pop %v715
    %v717 = vmul.f32 1.0, %v716
    %v718 = vxor.u32 %v709, 2147483648
    %v719 = vmul.f32 %v718, 1.442695
    %v720 = vpow.pop %v719
    %v721 = vadd.f32 %v720, 1.0
    %v722 = vrcp.pop %v721
    %v723 = vmul.f32 1.0, %v722
    %v724 = vtanh.pop %v710
    %v725 = vxor.u32 %v711, 2147483648
    %v726 = vmul.f32 %v725, 1.442695
    %v727 = vpow.pop %v726
    %v728 = vadd.f32 %v727, 1.0
    %v729 = vrcp.pop %v728
    %v730 = vmul.f32 1.0, %v729
    %v731 = vmul.f32 %v723, %v608
    %v732 = vmul.f32 %v717, %v724
    %v733 = vadd.f32 %v731, %v732
    %v734 = vtanh.pop %v733
    %v735 = vmul.f32 %v730, %v734
    %vm736 = vcmp.gt.s32.totalorder %v333, 1
    %v737 = vsel %vm736, 1, 0
    %738 = vset.pattern.permute.xlu0 0
    %739 = vperm.xlu0 %738, %v737
    %v740 = vpop.permute.xlu0 %739
    %vm741 = vcmp.eq.s32.totalorder %v740, 1
    %v742 = vsel %vm741, %v735, %v617
    %s743 = smul.u32 2, 4
    %s744 = smul.addr %s743, 8
    %s745 = scalar_lea.vmem [#allocation2], %s744
    %v746 = vld [vmem:[%s745] sm:$0xff]
    %v747 = vld [vmem:[%s745 + $0x8] sm:$0xff]
    %v748 = vld [vmem:[%s745 + $0x10] sm:$0xff]
    %v749 = vld [vmem:[%s745 + $0x18] sm:$0xff]
    %v750 = vpack.c.bf16 %v742, %v742
    %751 = vmatprep.subr.bf16.mxu0 %v466
    %752 = vmatpush1.bf16.msra.mxu0 %v465
    %753 = vmatprep.subr.bf16.mxu0 %v462
    %754 = vmatpush1.bf16.msra.mxu0 %v461
    %755 = vmatprep.subr.bf16.mxu0 %v458
    %756 = vmatpush1.bf16.msra.mxu0 %v457
    %757 = vmatprep.subr.bf16.mxu0 %v454
    %758 = vmatpush1.bf16.msra.mxu0 %v453
    %759 = vmatprep.subr.bf16.mxu0 %v450
    %760 = vmatpush1.bf16.msra.mxu0 %v449
    %761 = vmatprep.subr.bf16.mxu0 %v446
    %762 = vmatpush1.bf16.msra.mxu0 %v445
    %763 = vmatprep.subr.bf16.mxu0 %v442
    %764 = vmatpush1.bf16.msra.mxu0 %v441
    %765 = vmatprep.subr.bf16.mxu0 %v438
    %766 = vmatpush1.bf16.msra.mxu0 %v437
    %767 = vmatprep.subr.bf16.mxu0 0
    %768 = vmatpush2.bf16.msra.mxu0 0
    %769 = vmatprep.subr.bf16.mxu0 0
    %770 = vmatpush2.bf16.msra.mxu0 0
    %771 = vmatprep.subr.bf16.mxu0 0
    %772 = vmatpush2.bf16.msra.mxu0 0
    %773 = vmatprep.subr.bf16.mxu0 0
    %774 = vmatpush2.bf16.msra.mxu0 0
    %775 = vmatprep.subr.bf16.mxu0 0
    %776 = vmatpush2.bf16.msra.mxu0 0
    %777 = vmatprep.subr.bf16.mxu0 0
    %778 = vmatpush2.bf16.msra.mxu0 0
    %779 = vmatprep.subr.bf16.mxu0 0
    %780 = vmatpush2.bf16.msra.mxu0 0
    %781 = vmatprep.subr.bf16.mxu0 0
    %782 = vmatpush2.bf16.msra.mxu0 0
    %783 = vmatprep.mubr.bf16.mxu0 0
    %784 = vmatmul.mubr.bf16.gmra.mxu0 %v750
    %v785 = vpop.f32.mrf.mxu0
    %v786 = vadd.f32 0.0, %v785
    %v787 = vpop.f32.mrf.mxu0
    %v788 = vadd.f32 0.0, %v787
    %v789 = vpop.f32.mrf.mxu0
    %v790 = vpop.f32.mrf.mxu0
    %791 = vdwg.mxu0
    %792 = vmatprep.subr.bf16.mxu0 %v468
    %793 = vmatpush1.bf16.msra.mxu0 %v467
    %794 = vmatprep.subr.bf16.mxu0 %v464
    %795 = vmatpush1.bf16.msra.mxu0 %v463
    %796 = vmatprep.subr.bf16.mxu0 %v460
    %797 = vmatpush1.bf16.msra.mxu0 %v459
    %798 = vmatprep.subr.bf16.mxu0 %v456
    %799 = vmatpush1.bf16.msra.mxu0 %v455
    %800 = vmatprep.subr.bf16.mxu0 %v452
    %801 = vmatpush1.bf16.msra.mxu0 %v451
    %802 = vmatprep.subr.bf16.mxu0 %v448
    %803 = vmatpush1.bf16.msra.mxu0 %v447
    %804 = vmatprep.subr.bf16.mxu0 %v444
    %805 = vmatpush1.bf16.msra.mxu0 %v443
    %806 = vmatprep.subr.bf16.mxu0 %v440
    %807 = vmatpush1.bf16.msra.mxu0 %v439
    %808 = vmatprep.subr.bf16.mxu0 0
    %809 = vmatpush2.bf16.msra.mxu0 0
    %810 = vmatprep.subr.bf16.mxu0 0
    %811 = vmatpush2.bf16.msra.mxu0 0
    %812 = vmatprep.subr.bf16.mxu0 0
    %813 = vmatpush2.bf16.msra.mxu0 0
    %814 = vmatprep.subr.bf16.mxu0 0
    %815 = vmatpush2.bf16.msra.mxu0 0
    %816 = vmatprep.subr.bf16.mxu0 0
    %817 = vmatpush2.bf16.msra.mxu0 0
    %818 = vmatprep.subr.bf16.mxu0 0
    %819 = vmatpush2.bf16.msra.mxu0 0
    %820 = vmatprep.subr.bf16.mxu0 0
    %821 = vmatpush2.bf16.msra.mxu0 0
    %822 = vmatprep.subr.bf16.mxu0 0
    %823 = vmatpush2.bf16.msra.mxu0 0
    %824 = vmatprep.mubr.bf16.mxu0 0
    %825 = vmatmul.mubr.bf16.gmra.mxu0 %v750
    %v826 = vpop.f32.mrf.mxu0
    %v827 = vadd.f32 0.0, %v826
    %v828 = vpop.f32.mrf.mxu0
    %v829 = vadd.f32 0.0, %v828
    %v830 = vpop.f32.mrf.mxu0
    %v831 = vpop.f32.mrf.mxu0
    %832 = vdwg.mxu0
    %v833 = vadd.f32 %v746, %v786
    %v834 = vadd.f32 %v747, %v788
    %v835 = vadd.f32 %v748, %v827
    %v836 = vadd.f32 %v749, %v829
    %v837 = vxor.u32 %v833, 2147483648
    %v838 = vmul.f32 %v837, 1.442695
    %v839 = vpow.pop %v838
    %v840 = vadd.f32 %v839, 1.0
    %v841 = vrcp.pop %v840
    %v842 = vmul.f32 1.0, %v841
    %v843 = vxor.u32 %v834, 2147483648
    %v844 = vmul.f32 %v843, 1.442695
    %v845 = vpow.pop %v844
    %v846 = vadd.f32 %v845, 1.0
    %v847 = vrcp.pop %v846
    %v848 = vmul.f32 1.0, %v847
    %v849 = vtanh.pop %v835
    %v850 = vxor.u32 %v836, 2147483648
    %v851 = vmul.f32 %v850, 1.442695
    %v852 = vpow.pop %v851
    %v853 = vadd.f32 %v852, 1.0
    %v854 = vrcp.pop %v853
    %v855 = vmul.f32 1.0, %v854
    %v856 = vmul.f32 %v848, %v733
    %v857 = vmul.f32 %v842, %v849
    %v858 = vadd.f32 %v856, %v857
    %v859 = vtanh.pop %v858
    %v860 = vmul.f32 %v855, %v859
    %vm861 = vcmp.gt.s32.totalorder %v333, 2
    %v862 = vsel %vm861, 1, 0
    %863 = vset.pattern.permute.xlu0 0
    %864 = vperm.xlu0 %863, %v862
    %v865 = vpop.permute.xlu0 %864
    %vm866 = vcmp.eq.s32.totalorder %v865, 1
    %v867 = vsel %vm866, %v860, %v742
    %s868 = smul.u32 3, 4
    %s869 = smul.addr %s868, 8
    %s870 = scalar_lea.vmem [#allocation2], %s869
    %v871 = vld [vmem:[%s870] sm:$0xff]
    %v872 = vld [vmem:[%s870 + $0x8] sm:$0xff]
    %v873 = vld [vmem:[%s870 + $0x10] sm:$0xff]
    %v874 = vld [vmem:[%s870 + $0x18] sm:$0xff]
    %v875 = vpack.c.bf16 %v867, %v867
    %876 = vmatprep.subr.bf16.mxu0 %v466
    %877 = vmatpush1.bf16.msra.mxu0 %v465
    %878 = vmatprep.subr.bf16.mxu0 %v462
    %879 = vmatpush1.bf16.msra.mxu0 %v461
    %880 = vmatprep.subr.bf16.mxu0 %v458
    %881 = vmatpush1.bf16.msra.mxu0 %v457
    %882 = vmatprep.subr.bf16.mxu0 %v454
    %883 = vmatpush1.bf16.msra.mxu0 %v453
    %884 = vmatprep.subr.bf16.mxu0 %v450
    %885 = vmatpush1.bf16.msra.mxu0 %v449
    %886 = vmatprep.subr.bf16.mxu0 %v446
    %887 = vmatpush1.bf16.msra.mxu0 %v445
    %888 = vmatprep.subr.bf16.mxu0 %v442
    %889 = vmatpush1.bf16.msra.mxu0 %v441
    %890 = vmatprep.subr.bf16.mxu0 %v438
    %891 = vmatpush1.bf16.msra.mxu0 %v437
    %892 = vmatprep.subr.bf16.mxu0 0
    %893 = vmatpush2.bf16.msra.mxu0 0
    %894 = vmatprep.subr.bf16.mxu0 0
    %895 = vmatpush2.bf16.msra.mxu0 0
    %896 = vmatprep.subr.bf16.mxu0 0
    %897 = vmatpush2.bf16.msra.mxu0 0
    %898 = vmatprep.subr.bf16.mxu0 0
    %899 = vmatpush2.bf16.msra.mxu0 0
    %900 = vmatprep.subr.bf16.mxu0 0
    %901 = vmatpush2.bf16.msra.mxu0 0
    %902 = vmatprep.subr.bf16.mxu0 0
    %903 = vmatpush2.bf16.msra.mxu0 0
    %904 = vmatprep.subr.bf16.mxu0 0
    %905 = vmatpush2.bf16.msra.mxu0 0
    %906 = vmatprep.subr.bf16.mxu0 0
    %907 = vmatpush2.bf16.msra.mxu0 0
    %908 = vmatprep.mubr.bf16.mxu0 0
    %909 = vmatmul.mubr.bf16.gmra.mxu0 %v875
    %v910 = vpop.f32.mrf.mxu0
    %v911 = vadd.f32 0.0, %v910
    %v912 = vpop.f32.mrf.mxu0
    %v913 = vadd.f32 0.0, %v912
    %v914 = vpop.f32.mrf.mxu0
    %v915 = vpop.f32.mrf.mxu0
    %916 = vdwg.mxu0
    %917 = vmatprep.subr.bf16.mxu0 %v468
    %918 = vmatpush1.bf16.msra.mxu0 %v467
    %919 = vmatprep.subr.bf16.mxu0 %v464
    %920 = vmatpush1.bf16.msra.mxu0 %v463
    %921 = vmatprep.subr.bf16.mxu0 %v460
    %922 = vmatpush1.bf16.msra.mxu0 %v459
    %923 = vmatprep.subr.bf16.mxu0 %v456
    %924 = vmatpush1.bf16.msra.mxu0 %v455
    %925 = vmatprep.subr.bf16.mxu0 %v452
    %926 = vmatpush1.bf16.msra.mxu0 %v451
    %927 = vmatprep.subr.bf16.mxu0 %v448
    %928 = vmatpush1.bf16.msra.mxu0 %v447
    %929 = vmatprep.subr.bf16.mxu0 %v444
    %930 = vmatpush1.bf16.msra.mxu0 %v443
    %931 = vmatprep.subr.bf16.mxu0 %v440
    %932 = vmatpush1.bf16.msra.mxu0 %v439
    %933 = vmatprep.subr.bf16.mxu0 0
    %934 = vmatpush2.bf16.msra.mxu0 0
    %935 = vmatprep.subr.bf16.mxu0 0
    %936 = vmatpush2.bf16.msra.mxu0 0
    %937 = vmatprep.subr.bf16.mxu0 0
    %938 = vmatpush2.bf16.msra.mxu0 0
    %939 = vmatprep.subr.bf16.mxu0 0
    %940 = vmatpush2.bf16.msra.mxu0 0
    %941 = vmatprep.subr.bf16.mxu0 0
    %942 = vmatpush2.bf16.msra.mxu0 0
    %943 = vmatprep.subr.bf16.mxu0 0
    %944 = vmatpush2.bf16.msra.mxu0 0
    %945 = vmatprep.subr.bf16.mxu0 0
    %946 = vmatpush2.bf16.msra.mxu0 0
    %947 = vmatprep.subr.bf16.mxu0 0
    %948 = vmatpush2.bf16.msra.mxu0 0
    %949 = vmatprep.mubr.bf16.mxu0 0
    %950 = vmatmul.mubr.bf16.gmra.mxu0 %v875
    %v951 = vpop.f32.mrf.mxu0
    %v952 = vadd.f32 0.0, %v951
    %v953 = vpop.f32.mrf.mxu0
    %v954 = vadd.f32 0.0, %v953
    %v955 = vpop.f32.mrf.mxu0
    %v956 = vpop.f32.mrf.mxu0
    %957 = vdwg.mxu0
    %v958 = vadd.f32 %v871, %v911
    %v959 = vadd.f32 %v872, %v913
    %v960 = vadd.f32 %v873, %v952
    %v961 = vadd.f32 %v874, %v954
    %v962 = vxor.u32 %v958, 2147483648
    %v963 = vmul.f32 %v962, 1.442695
    %v964 = vpow.pop %v963
    %v965 = vadd.f32 %v964, 1.0
    %v966 = vrcp.pop %v965
    %v967 = vmul.f32 1.0, %v966
    %v968 = vxor.u32 %v959, 2147483648
    %v969 = vmul.f32 %v968, 1.442695
    %v970 = vpow.pop %v969
    %v971 = vadd.f32 %v970, 1.0
    %v972 = vrcp.pop %v971
    %v973 = vmul.f32 1.0, %v972
    %v974 = vtanh.pop %v960
    %v975 = vxor.u32 %v961, 2147483648
    %v976 = vmul.f32 %v975, 1.442695
    %v977 = vpow.pop %v976
    %v978 = vadd.f32 %v977, 1.0
    %v979 = vrcp.pop %v978
    %v980 = vmul.f32 1.0, %v979
    %v981 = vmul.f32 %v973, %v858
    %v982 = vmul.f32 %v967, %v974
    %v983 = vadd.f32 %v981, %v982
    %v984 = vtanh.pop %v983
    %v985 = vmul.f32 %v980, %v984
    %vm986 = vcmp.gt.s32.totalorder %v333, 3
    %v987 = vsel %vm986, 1, 0
    %988 = vset.pattern.permute.xlu0 0
    %989 = vperm.xlu0 %988, %v987
    %v990 = vpop.permute.xlu0 %989
    %vm991 = vcmp.eq.s32.totalorder %v990, 1
    %v992 = vsel %vm991, %v985, %v867
    %s993 = smul.u32 4, 4
    %s994 = smul.addr %s993, 8
    %s995 = scalar_lea.vmem [#allocation2], %s994
    %v996 = vld [vmem:[%s995] sm:$0xff]
    %v997 = vld [vmem:[%s995 + $0x8] sm:$0xff]
    %v998 = vld [vmem:[%s995 + $0x10] sm:$0xff]
    %v999 = vld [vmem:[%s995 + $0x18] sm:$0xff]
    %v1000 = vpack.c.bf16 %v992, %v992
    %1001 = vmatprep.subr.bf16.mxu0 %v466
    %1002 = vmatpush1.bf16.msra.mxu0 %v465
    %1003 = vmatprep.subr.bf16.mxu0 %v462
    %1004 = vmatpush1.bf16.msra.mxu0 %v461
    %1005 = vmatprep.subr.bf16.mxu0 %v458
    %1006 = vmatpush1.bf16.msra.mxu0 %v457
    %1007 = vmatprep.subr.bf16.mxu0 %v454
    %1008 = vmatpush1.bf16.msra.mxu0 %v453
    %1009 = vmatprep.subr.bf16.mxu0 %v450
    %1010 = vmatpush1.bf16.msra.mxu0 %v449
    %1011 = vmatprep.subr.bf16.mxu0 %v446
    %1012 = vmatpush1.bf16.msra.mxu0 %v445
    %1013 = vmatprep.subr.bf16.mxu0 %v442
    %1014 = vmatpush1.bf16.msra.mxu0 %v441
    %1015 = vmatprep.subr.bf16.mxu0 %v438
    %1016 = vmatpush1.bf16.msra.mxu0 %v437
    %1017 = vmatprep.subr.bf16.mxu0 0
    %1018 = vmatpush2.bf16.msra.mxu0 0
    %1019 = vmatprep.subr.bf16.mxu0 0
    %1020 = vmatpush2.bf16.msra.mxu0 0
    %1021 = vmatprep.subr.bf16.mxu0 0
    %1022 = vmatpush2.bf16.msra.mxu0 0
    %1023 = vmatprep.subr.bf16.mxu0 0
    %1024 = vmatpush2.bf16.msra.mxu0 0
    %1025 = vmatprep.subr.bf16.mxu0 0
    %1026 = vmatpush2.bf16.msra.mxu0 0
    %1027 = vmatprep.subr.bf16.mxu0 0
    %1028 = vmatpush2.bf16.msra.mxu0 0
    %1029 = vmatprep.subr.bf16.mxu0 0
    %1030 = vmatpush2.bf16.msra.mxu0 0
    %1031 = vmatprep.subr.bf16.mxu0 0
    %1032 = vmatpush2.bf16.msra.mxu0 0
    %1033 = vmatprep.mubr.bf16.mxu0 0
    %1034 = vmatmul.mubr.bf16.gmra.mxu0 %v1000
    %v1035 = vpop.f32.mrf.mxu0
    %v1036 = vadd.f32 0.0, %v1035
    %v1037 = vpop.f32.mrf.mxu0
    %v1038 = vadd.f32 0.0, %v1037
    %v1039 = vpop.f32.mrf.mxu0
    %v1040 = vpop.f32.mrf.mxu0
    %1041 = vdwg.mxu0
    %1042 = vmatprep.subr.bf16.mxu0 %v468
    %1043 = vmatpush1.bf16.msra.mxu0 %v467
    %1044 = vmatprep.subr.bf16.mxu0 %v464
    %1045 = vmatpush1.bf16.msra.mxu0 %v463
    %1046 = vmatprep.subr.bf16.mxu0 %v460
    %1047 = vmatpush1.bf16.msra.mxu0 %v459
    %1048 = vmatprep.subr.bf16.mxu0 %v456
    %1049 = vmatpush1.bf16.msra.mxu0 %v455
    %1050 = vmatprep.subr.bf16.mxu0 %v452
    %1051 = vmatpush1.bf16.msra.mxu0 %v451
    %1052 = vmatprep.subr.bf16.mxu0 %v448
    %1053 = vmatpush1.bf16.msra.mxu0 %v447
    %1054 = vmatprep.subr.bf16.mxu0 %v444
    %1055 = vmatpush1.bf16.msra.mxu0 %v443
    %1056 = vmatprep.subr.bf16.mxu0 %v440
    %1057 = vmatpush1.bf16.msra.mxu0 %v439
    %1058 = vmatprep.subr.bf16.mxu0 0
    %1059 = vmatpush2.bf16.msra.mxu0 0
    %1060 = vmatprep.subr.bf16.mxu0 0
    %1061 = vmatpush2.bf16.msra.mxu0 0
    %1062 = vmatprep.subr.bf16.mxu0 0
    %1063 = vmatpush2.bf16.msra.mxu0 0
    %1064 = vmatprep.subr.bf16.mxu0 0
    %1065 = vmatpush2.bf16.msra.mxu0 0
    %1066 = vmatprep.subr.bf16.mxu0 0
    %1067 = vmatpush2.bf16.msra.mxu0 0
    %1068 = vmatprep.subr.bf16.mxu0 0
    %1069 = vmatpush2.bf16.msra.mxu0 0
    %1070 = vmatprep.subr.bf16.mxu0 0
    %1071 = vmatpush2.bf16.msra.mxu0 0
    %1072 = vmatprep.subr.bf16.mxu0 0
    %1073 = vmatpush2.bf16.msra.mxu0 0
    %1074 = vmatprep.mubr.bf16.mxu0 0
    %1075 = vmatmul.mubr.bf16.gmra.mxu0 %v1000
    %v1076 = vpop.f32.mrf.mxu0
    %v1077 = vadd.f32 0.0, %v1076
    %v1078 = vpop.f32.mrf.mxu0
    %v1079 = vadd.f32 0.0, %v1078
    %v1080 = vpop.f32.mrf.mxu0
    %v1081 = vpop.f32.mrf.mxu0
    %1082 = vdwg.mxu0
    %v1083 = vadd.f32 %v996, %v1036
    %v1084 = vadd.f32 %v997, %v1038
    %v1085 = vadd.f32 %v998, %v1077
    %v1086 = vadd.f32 %v999, %v1079
    %v1087 = vxor.u32 %v1083, 2147483648
    %v1088 = vmul.f32 %v1087, 1.442695
    %v1089 = vpow.pop %v1088
    %v1090 = vadd.f32 %v1089, 1.0
    %v1091 = vrcp.pop %v1090
    %v1092 = vmul.f32 1.0, %v1091
    %v1093 = vxor.u32 %v1084, 2147483648
    %v1094 = vmul.f32 %v1093, 1.442695
    %v1095 = vpow.pop %v1094
    %v1096 = vadd.f32 %v1095, 1.0
    %v1097 = vrcp.pop %v1096
    %v1098 = vmul.f32 1.0, %v1097
    %v1099 = vtanh.pop %v1085
    %v1100 = vxor.u32 %v1086, 2147483648
    %v1101 = vmul.f32 %v1100, 1.442695
    %v1102 = vpow.pop %v1101
    %v1103 = vadd.f32 %v1102, 1.0
    %v1104 = vrcp.pop %v1103
    %v1105 = vmul.f32 1.0, %v1104
    %v1106 = vmul.f32 %v1098, %v983
    %v1107 = vmul.f32 %v1092, %v1099
    %v1108 = vadd.f32 %v1106, %v1107
    %v1109 = vtanh.pop %v1108
    %v1110 = vmul.f32 %v1105, %v1109
    %vm1111 = vcmp.gt.s32.totalorder %v333, 4
    %v1112 = vsel %vm1111, 1, 0
    %1113 = vset.pattern.permute.xlu0 0
    %1114 = vperm.xlu0 %1113, %v1112
    %v1115 = vpop.permute.xlu0 %1114
    %vm1116 = vcmp.eq.s32.totalorder %v1115, 1
    %v1117 = vsel %vm1116, %v1110, %v992
    %s1118 = smul.u32 5, 4
    %s1119 = smul.addr %s1118, 8
    %s1120 = scalar_lea.vmem [#allocation2], %s1119
    %v1121 = vld [vmem:[%s1120] sm:$0xff]
    %v1122 = vld [vmem:[%s1120 + $0x8] sm:$0xff]
    %v1123 = vld [vmem:[%s1120 + $0x10] sm:$0xff]
    %v1124 = vld [vmem:[%s1120 + $0x18] sm:$0xff]
    %v1125 = vpack.c.bf16 %v1117, %v1117
    %1126 = vmatprep.subr.bf16.mxu0 %v466
    %1127 = vmatpush1.bf16.msra.mxu0 %v465
    %1128 = vmatprep.subr.bf16.mxu0 %v462
    %1129 = vmatpush1.bf16.msra.mxu0 %v461
    %1130 = vmatprep.subr.bf16.mxu0 %v458
    %1131 = vmatpush1.bf16.msra.mxu0 %v457
    %1132 = vmatprep.subr.bf16.mxu0 %v454
    %1133 = vmatpush1.bf16.msra.mxu0 %v453
    %1134 = vmatprep.subr.bf16.mxu0 %v450
    %1135 = vmatpush1.bf16.msra.mxu0 %v449
    %1136 = vmatprep.subr.bf16.mxu0 %v446
    %1137 = vmatpush1.bf16.msra.mxu0 %v445
    %1138 = vmatprep.subr.bf16.mxu0 %v442
    %1139 = vmatpush1.bf16.msra.mxu0 %v441
    %1140 = vmatprep.subr.bf16.mxu0 %v438
    %1141 = vmatpush1.bf16.msra.mxu0 %v437
    %1142 = vmatprep.subr.bf16.mxu0 0
    %1143 = vmatpush2.bf16.msra.mxu0 0
    %1144 = vmatprep.subr.bf16.mxu0 0
    %1145 = vmatpush2.bf16.msra.mxu0 0
    %1146 = vmatprep.subr.bf16.mxu0 0
    %1147 = vmatpush2.bf16.msra.mxu0 0
    %1148 = vmatprep.subr.bf16.mxu0 0
    %1149 = vmatpush2.bf16.msra.mxu0 0
    %1150 = vmatprep.subr.bf16.mxu0 0
    %1151 = vmatpush2.bf16.msra.mxu0 0
    %1152 = vmatprep.subr.bf16.mxu0 0
    %1153 = vmatpush2.bf16.msra.mxu0 0
    %1154 = vmatprep.subr.bf16.mxu0 0
    %1155 = vmatpush2.bf16.msra.mxu0 0
    %1156 = vmatprep.subr.bf16.mxu0 0
    %1157 = vmatpush2.bf16.msra.mxu0 0
    %1158 = vmatprep.mubr.bf16.mxu0 0
    %1159 = vmatmul.mubr.bf16.gmra.mxu0 %v1125
    %v1160 = vpop.f32.mrf.mxu0
    %v1161 = vadd.f32 0.0, %v1160
    %v1162 = vpop.f32.mrf.mxu0
    %v1163 = vadd.f32 0.0, %v1162
    %v1164 = vpop.f32.mrf.mxu0
    %v1165 = vpop.f32.mrf.mxu0
    %1166 = vdwg.mxu0
    %1167 = vmatprep.subr.bf16.mxu0 %v468
    %1168 = vmatpush1.bf16.msra.mxu0 %v467
    %1169 = vmatprep.subr.bf16.mxu0 %v464
    %1170 = vmatpush1.bf16.msra.mxu0 %v463
    %1171 = vmatprep.subr.bf16.mxu0 %v460
    %1172 = vmatpush1.bf16.msra.mxu0 %v459
    %1173 = vmatprep.subr.bf16.mxu0 %v456
    %1174 = vmatpush1.bf16.msra.mxu0 %v455
    %1175 = vmatprep.subr.bf16.mxu0 %v452
    %1176 = vmatpush1.bf16.msra.mxu0 %v451
    %1177 = vmatprep.subr.bf16.mxu0 %v448
    %1178 = vmatpush1.bf16.msra.mxu0 %v447
    %1179 = vmatprep.subr.bf16.mxu0 %v444
    %1180 = vmatpush1.bf16.msra.mxu0 %v443
    %1181 = vmatprep.subr.bf16.mxu0 %v440
    %1182 = vmatpush1.bf16.msra.mxu0 %v439
    %1183 = vmatprep.subr.bf16.mxu0 0
    %1184 = vmatpush2.bf16.msra.mxu0 0
    %1185 = vmatprep.subr.bf16.mxu0 0
    %1186 = vmatpush2.bf16.msra.mxu0 0
    %1187 = vmatprep.subr.bf16.mxu0 0
    %1188 = vmatpush2.bf16.msra.mxu0 0
    %1189 = vmatprep.subr.bf16.mxu0 0
    %1190 = vmatpush2.bf16.msra.mxu0 0
    %1191 = vmatprep.subr.bf16.mxu0 0
    %1192 = vmatpush2.bf16.msra.mxu0 0
    %1193 = vmatprep.subr.bf16.mxu0 0
    %1194 = vmatpush2.bf16.msra.mxu0 0
    %1195 = vmatprep.subr.bf16.mxu0 0
    %1196 = vmatpush2.bf16.msra.mxu0 0
    %1197 = vmatprep.subr.bf16.mxu0 0
    %1198 = vmatpush2.bf16.msra.mxu0 0
    %1199 = vmatprep.mubr.bf16.mxu0 0
    %1200 = vmatmul.mubr.bf16.gmra.mxu0 %v1125
    %v1201 = vpop.f32.mrf.mxu0
    %v1202 = vadd.f32 0.0, %v1201
    %v1203 = vpop.f32.mrf.mxu0
    %v1204 = vadd.f32 0.0, %v1203
    %v1205 = vpop.f32.mrf.mxu0
    %v1206 = vpop.f32.mrf.mxu0
    %1207 = vdwg.mxu0
    %v1208 = vadd.f32 %v1121, %v1161
    %v1209 = vadd.f32 %v1122, %v1163
    %v1210 = vadd.f32 %v1123, %v1202
    %v1211 = vadd.f32 %v1124, %v1204
    %v1212 = vxor.u32 %v1208, 2147483648
    %v1213 = vmul.f32 %v1212, 1.442695
    %v1214 = vpow.pop %v1213
    %v1215 = vadd.f32 %v1214, 1.0
    %v1216 = vrcp.pop %v1215
    %v1217 = vmul.f32 1.0, %v1216
    %v1218 = vxor.u32 %v1209, 2147483648
    %v1219 = vmul.f32 %v1218, 1.442695
    %v1220 = vpow.pop %v1219
    %v1221 = vadd.f32 %v1220, 1.0
    %v1222 = vrcp.pop %v1221
    %v1223 = vmul.f32 1.0, %v1222
    %v1224 = vtanh.pop %v1210
    %v1225 = vxor.u32 %v1211, 2147483648
    %v1226 = vmul.f32 %v1225, 1.442695
    %v1227 = vpow.pop %v1226
    %v1228 = vadd.f32 %v1227, 1.0
    %v1229 = vrcp.pop %v1228
    %v1230 = vmul.f32 1.0, %v1229
    %v1231 = vmul.f32 %v1223, %v1108
    %v1232 = vmul.f32 %v1217, %v1224
    %v1233 = vadd.f32 %v1231, %v1232
    %v1234 = vtanh.pop %v1233
    %v1235 = vmul.f32 %v1230, %v1234
    %vm1236 = vcmp.gt.s32.totalorder %v333, 5
    %v1237 = vsel %vm1236, 1, 0
    %1238 = vset.pattern.permute.xlu0 0
    %1239 = vperm.xlu0 %1238, %v1237
    %v1240 = vpop.permute.xlu0 %1239
    %vm1241 = vcmp.eq.s32.totalorder %v1240, 1
    %v1242 = vsel %vm1241, %v1235, %v1117
    %s1243 = smul.u32 6, 4
    %s1244 = smul.addr %s1243, 8
    %s1245 = scalar_lea.vmem [#allocation2], %s1244
    %v1246 = vld [vmem:[%s1245] sm:$0xff]
    %v1247 = vld [vmem:[%s1245 + $0x8] sm:$0xff]
    %v1248 = vld [vmem:[%s1245 + $0x10] sm:$0xff]
    %v1249 = vld [vmem:[%s1245 + $0x18] sm:$0xff]
    %v1250 = vpack.c.bf16 %v1242, %v1242
    %1251 = vmatprep.subr.bf16.mxu0 %v466
    %1252 = vmatpush1.bf16.msra.mxu0 %v465
    %1253 = vmatprep.subr.bf16.mxu0 %v462
    %1254 = vmatpush1.bf16.msra.mxu0 %v461
    %1255 = vmatprep.subr.bf16.mxu0 %v458
    %1256 = vmatpush1.bf16.msra.mxu0 %v457
    %1257 = vmatprep.subr.bf16.mxu0 %v454
    %1258 = vmatpush1.bf16.msra.mxu0 %v453
    %1259 = vmatprep.subr.bf16.mxu0 %v450
    %1260 = vmatpush1.bf16.msra.mxu0 %v449
    %1261 = vmatprep.subr.bf16.mxu0 %v446
    %1262 = vmatpush1.bf16.msra.mxu0 %v445
    %1263 = vmatprep.subr.bf16.mxu0 %v442
    %1264 = vmatpush1.bf16.msra.mxu0 %v441
    %1265 = vmatprep.subr.bf16.mxu0 %v438
    %1266 = vmatpush1.bf16.msra.mxu0 %v437
    %1267 = vmatprep.subr.bf16.mxu0 0
    %1268 = vmatpush2.bf16.msra.mxu0 0
    %1269 = vmatprep.subr.bf16.mxu0 0
    %1270 = vmatpush2.bf16.msra.mxu0 0
    %1271 = vmatprep.subr.bf16.mxu0 0
    %1272 = vmatpush2.bf16.msra.mxu0 0
    %1273 = vmatprep.subr.bf16.mxu0 0
    %1274 = vmatpush2.bf16.msra.mxu0 0
    %1275 = vmatprep.subr.bf16.mxu0 0
    %1276 = vmatpush2.bf16.msra.mxu0 0
    %1277 = vmatprep.subr.bf16.mxu0 0
    %1278 = vmatpush2.bf16.msra.mxu0 0
    %1279 = vmatprep.subr.bf16.mxu0 0
    %1280 = vmatpush2.bf16.msra.mxu0 0
    %1281 = vmatprep.subr.bf16.mxu0 0
    %1282 = vmatpush2.bf16.msra.mxu0 0
    %1283 = vmatprep.mubr.bf16.mxu0 0
    %1284 = vmatmul.mubr.bf16.gmra.mxu0 %v1250
    %v1285 = vpop.f32.mrf.mxu0
    %v1286 = vadd.f32 0.0, %v1285
    %v1287 = vpop.f32.mrf.mxu0
    %v1288 = vadd.f32 0.0, %v1287
    %v1289 = vpop.f32.mrf.mxu0
    %v1290 = vpop.f32.mrf.mxu0
    %1291 = vdwg.mxu0
    %1292 = vmatprep.subr.bf16.mxu0 %v468
    %1293 = vmatpush1.bf16.msra.mxu0 %v467
    %1294 = vmatprep.subr.bf16.mxu0 %v464
    %1295 = vmatpush1.bf16.msra.mxu0 %v463
    %1296 = vmatprep.subr.bf16.mxu0 %v460
    %1297 = vmatpush1.bf16.msra.mxu0 %v459
    %1298 = vmatprep.subr.bf16.mxu0 %v456
    %1299 = vmatpush1.bf16.msra.mxu0 %v455
    %1300 = vmatprep.subr.bf16.mxu0 %v452
    %1301 = vmatpush1.bf16.msra.mxu0 %v451
    %1302 = vmatprep.subr.bf16.mxu0 %v448
    %1303 = vmatpush1.bf16.msra.mxu0 %v447
    %1304 = vmatprep.subr.bf16.mxu0 %v444
    %1305 = vmatpush1.bf16.msra.mxu0 %v443
    %1306 = vmatprep.subr.bf16.mxu0 %v440
    %1307 = vmatpush1.bf16.msra.mxu0 %v439
    %1308 = vmatprep.subr.bf16.mxu0 0
    %1309 = vmatpush2.bf16.msra.mxu0 0
    %1310 = vmatprep.subr.bf16.mxu0 0
    %1311 = vmatpush2.bf16.msra.mxu0 0
    %1312 = vmatprep.subr.bf16.mxu0 0
    %1313 = vmatpush2.bf16.msra.mxu0 0
    %1314 = vmatprep.subr.bf16.mxu0 0
    %1315 = vmatpush2.bf16.msra.mxu0 0
    %1316 = vmatprep.subr.bf16.mxu0 0
    %1317 = vmatpush2.bf16.msra.mxu0 0
    %1318 = vmatprep.subr.bf16.mxu0 0
    %1319 = vmatpush2.bf16.msra.mxu0 0
    %1320 = vmatprep.subr.bf16.mxu0 0
    %1321 = vmatpush2.bf16.msra.mxu0 0
    %1322 = vmatprep.subr.bf16.mxu0 0
    %1323 = vmatpush2.bf16.msra.mxu0 0
    %1324 = vmatprep.mubr.bf16.mxu0 0
    %1325 = vmatmul.mubr.bf16.gmra.mxu0 %v1250
    %v1326 = vpop.f32.mrf.mxu0
    %v1327 = vadd.f32 0.0, %v1326
    %v1328 = vpop.f32.mrf.mxu0
    %v1329 = vadd.f32 0.0, %v1328
    %v1330 = vpop.f32.mrf.mxu0
    %v1331 = vpop.f32.mrf.mxu0
    %1332 = vdwg.mxu0
    %v1333 = vadd.f32 %v1246, %v1286
    %v1334 = vadd.f32 %v1247, %v1288
    %v1335 = vadd.f32 %v1248, %v1327
    %v1336 = vadd.f32 %v1249, %v1329
    %v1337 = vxor.u32 %v1333, 2147483648
    %v1338 = vmul.f32 %v1337, 1.442695
    %v1339 = vpow.pop %v1338
    %v1340 = vadd.f32 %v1339, 1.0
    %v1341 = vrcp.pop %v1340
    %v1342 = vmul.f32 1.0, %v1341
    %v1343 = vxor.u32 %v1334, 2147483648
    %v1344 = vmul.f32 %v1343, 1.442695
    %v1345 = vpow.pop %v1344
    %v1346 = vadd.f32 %v1345, 1.0
    %v1347 = vrcp.pop %v1346
    %v1348 = vmul.f32 1.0, %v1347
    %v1349 = vtanh.pop %v1335
    %v1350 = vxor.u32 %v1336, 2147483648
    %v1351 = vmul.f32 %v1350, 1.442695
    %v1352 = vpow.pop %v1351
    %v1353 = vadd.f32 %v1352, 1.0
    %v1354 = vrcp.pop %v1353
    %v1355 = vmul.f32 1.0, %v1354
    %v1356 = vmul.f32 %v1348, %v1233
    %v1357 = vmul.f32 %v1342, %v1349
    %v1358 = vadd.f32 %v1356, %v1357
    %v1359 = vtanh.pop %v1358
    %v1360 = vmul.f32 %v1355, %v1359
    %vm1361 = vcmp.gt.s32.totalorder %v333, 6
    %v1362 = vsel %vm1361, 1, 0
    %1363 = vset.pattern.permute.xlu0 0
    %1364 = vperm.xlu0 %1363, %v1362
    %v1365 = vpop.permute.xlu0 %1364
    %vm1366 = vcmp.eq.s32.totalorder %v1365, 1
    %v1367 = vsel %vm1366, %v1360, %v1242
    %s1368 = smul.u32 7, 4
    %s1369 = smul.addr %s1368, 8
    %s1370 = scalar_lea.vmem [#allocation2], %s1369
    %v1371 = vld [vmem:[%s1370] sm:$0xff]
    %v1372 = vld [vmem:[%s1370 + $0x8] sm:$0xff]
    %v1373 = vld [vmem:[%s1370 + $0x10] sm:$0xff]
    %v1374 = vld [vmem:[%s1370 + $0x18] sm:$0xff]
    %v1375 = vpack.c.bf16 %v1367, %v1367
    %1376 = vmatprep.subr.bf16.mxu0 %v466
    %1377 = vmatpush1.bf16.msra.mxu0 %v465
    %1378 = vmatprep.subr.bf16.mxu0 %v462
    %1379 = vmatpush1.bf16.msra.mxu0 %v461
    %1380 = vmatprep.subr.bf16.mxu0 %v458
    %1381 = vmatpush1.bf16.msra.mxu0 %v457
    %1382 = vmatprep.subr.bf16.mxu0 %v454
    %1383 = vmatpush1.bf16.msra.mxu0 %v453
    %1384 = vmatprep.subr.bf16.mxu0 %v450
    %1385 = vmatpush1.bf16.msra.mxu0 %v449
    %1386 = vmatprep.subr.bf16.mxu0 %v446
    %1387 = vmatpush1.bf16.msra.mxu0 %v445
    %1388 = vmatprep.subr.bf16.mxu0 %v442
    %1389 = vmatpush1.bf16.msra.mxu0 %v441
    %1390 = vmatprep.subr.bf16.mxu0 %v438
    %1391 = vmatpush1.bf16.msra.mxu0 %v437
    %1392 = vmatprep.subr.bf16.mxu0 0
    %1393 = vmatpush2.bf16.msra.mxu0 0
    %1394 = vmatprep.subr.bf16.mxu0 0
    %1395 = vmatpush2.bf16.msra.mxu0 0
    %1396 = vmatprep.subr.bf16.mxu0 0
    %1397 = vmatpush2.bf16.msra.mxu0 0
    %1398 = vmatprep.subr.bf16.mxu0 0
    %1399 = vmatpush2.bf16.msra.mxu0 0
    %1400 = vmatprep.subr.bf16.mxu0 0
    %1401 = vmatpush2.bf16.msra.mxu0 0
    %1402 = vmatprep.subr.bf16.mxu0 0
    %1403 = vmatpush2.bf16.msra.mxu0 0
    %1404 = vmatprep.subr.bf16.mxu0 0
    %1405 = vmatpush2.bf16.msra.mxu0 0
    %1406 = vmatprep.subr.bf16.mxu0 0
    %1407 = vmatpush2.bf16.msra.mxu0 0
    %1408 = vmatprep.mubr.bf16.mxu0 0
    %1409 = vmatmul.mubr.bf16.gmra.mxu0 %v1375
    %v1410 = vpop.f32.mrf.mxu0
    %v1411 = vadd.f32 0.0, %v1410
    %v1412 = vpop.f32.mrf.mxu0
    %v1413 = vadd.f32 0.0, %v1412
    %v1414 = vpop.f32.mrf.mxu0
    %v1415 = vpop.f32.mrf.mxu0
    %1416 = vdwg.mxu0
    %1417 = vmatprep.subr.bf16.mxu0 %v468
    %1418 = vmatpush1.bf16.msra.mxu0 %v467
    %1419 = vmatprep.subr.bf16.mxu0 %v464
    %1420 = vmatpush1.bf16.msra.mxu0 %v463
    %1421 = vmatprep.subr.bf16.mxu0 %v460
    %1422 = vmatpush1.bf16.msra.mxu0 %v459
    %1423 = vmatprep.subr.bf16.mxu0 %v456
    %1424 = vmatpush1.bf16.msra.mxu0 %v455
    %1425 = vmatprep.subr.bf16.mxu0 %v452
    %1426 = vmatpush1.bf16.msra.mxu0 %v451
    %1427 = vmatprep.subr.bf16.mxu0 %v448
    %1428 = vmatpush1.bf16.msra.mxu0 %v447
    %1429 = vmatprep.subr.bf16.mxu0 %v444
    %1430 = vmatpush1.bf16.msra.mxu0 %v443
    %1431 = vmatprep.subr.bf16.mxu0 %v440
    %1432 = vmatpush1.bf16.msra.mxu0 %v439
    %1433 = vmatprep.subr.bf16.mxu0 0
    %1434 = vmatpush2.bf16.msra.mxu0 0
    %1435 = vmatprep.subr.bf16.mxu0 0
    %1436 = vmatpush2.bf16.msra.mxu0 0
    %1437 = vmatprep.subr.bf16.mxu0 0
    %1438 = vmatpush2.bf16.msra.mxu0 0
    %1439 = vmatprep.subr.bf16.mxu0 0
    %1440 = vmatpush2.bf16.msra.mxu0 0
    %1441 = vmatprep.subr.bf16.mxu0 0
    %1442 = vmatpush2.bf16.msra.mxu0 0
    %1443 = vmatprep.subr.bf16.mxu0 0
    %1444 = vmatpush2.bf16.msra.mxu0 0
    %1445 = vmatprep.subr.bf16.mxu0 0
    %1446 = vmatpush2.bf16.msra.mxu0 0
    %1447 = vmatprep.subr.bf16.mxu0 0
    %1448 = vmatpush2.bf16.msra.mxu0 0
    %1449 = vmatprep.mubr.bf16.mxu0 0
    %1450 = vmatmul.mubr.bf16.gmra.mxu0 %v1375
    %v1451 = vpop.f32.mrf.mxu0
    %v1452 = vadd.f32 0.0, %v1451
    %v1453 = vpop.f32.mrf.mxu0
    %v1454 = vadd.f32 0.0, %v1453
    %v1455 = vpop.f32.mrf.mxu0
    %v1456 = vpop.f32.mrf.mxu0
    %1457 = vdwg.mxu0
    %v1458 = vadd.f32 %v1371, %v1411
    %v1459 = vadd.f32 %v1372, %v1413
    %v1460 = vadd.f32 %v1373, %v1452
    %v1461 = vadd.f32 %v1374, %v1454
    %v1462 = vxor.u32 %v1458, 2147483648
    %v1463 = vmul.f32 %v1462, 1.442695
    %v1464 = vpow.pop %v1463
    %v1465 = vadd.f32 %v1464, 1.0
    %v1466 = vrcp.pop %v1465
    %v1467 = vmul.f32 1.0, %v1466
    %v1468 = vxor.u32 %v1459, 2147483648
    %v1469 = vmul.f32 %v1468, 1.442695
    %v1470 = vpow.pop %v1469
    %v1471 = vadd.f32 %v1470, 1.0
    %v1472 = vrcp.pop %v1471
    %v1473 = vmul.f32 1.0, %v1472
    %v1474 = vtanh.pop %v1460
    %v1475 = vxor.u32 %v1461, 2147483648
    %v1476 = vmul.f32 %v1475, 1.442695
    %v1477 = vpow.pop %v1476
    %v1478 = vadd.f32 %v1477, 1.0
    %v1479 = vrcp.pop %v1478
    %v1480 = vmul.f32 1.0, %v1479
    %v1481 = vmul.f32 %v1473, %v1358
    %v1482 = vmul.f32 %v1467, %v1474
    %v1483 = vadd.f32 %v1481, %v1482
    %v1484 = vtanh.pop %v1483
    %v1485 = vmul.f32 %v1480, %v1484
    %vm1486 = vcmp.gt.s32.totalorder %v333, 7
    %v1487 = vsel %vm1486, 1, 0
    %1488 = vset.pattern.permute.xlu0 0
    %1489 = vperm.xlu0 %1488, %v1487
    %v1490 = vpop.permute.xlu0 %1489
    %vm1491 = vcmp.eq.s32.totalorder %v1490, 1
    %v1492 = vsel %vm1491, %v1485, %v1367
    %1493 = vst [vmem:[#allocation6] sm:$0xff] %v1492
    // Predicated region
    $region26: #{tpu_custom_call.1} parent=1 // pred_check
      _
    $region27: #{tpu_custom_call.1} parent=1 // pred_check_branch
      %1495 = sbr.rel (0) target = $region29
    $region28: #{tpu_custom_call.1} parent=1 // pred_region
      %s1497 = ssub.s32 128, 128
      %1498 = vsyncadd [#allocation5], %s1497
      %s1500 = sshll.u32 [#allocation6], 4
      %s1501 = int_to_ptr.vmem [resolvable:$true] %s1500
      %1503 = dma.vmem_to_hbm [thread:$0]  %s1501, 128, %s5, [#allocation5]
    $region29: #{tpu_custom_call.1} parent=1 // pred_fallthru
      _
    // Predicated region
    $region30: #{tpu_custom_call.1} parent=1 // pred_check
      _
    $region31: #{tpu_custom_call.1} parent=1 // pred_check_branch
      %1505 = sbr.rel (0) target = $region33
    $region32: #{tpu_custom_call.1} parent=1 // pred_region
      %1506 = dma.done [#allocation5], 128
    $region33: #{tpu_custom_call.1} parent=1 // pred_fallthru
      _
    %1507 = vsyncpa [#allocation4], 1
    %1508 = vsyncpa [#allocation5], 1

</llo_original>
